<compile_context>
chip_gen: v7x
topology: tpu7x:2x2x1
jax: 0.10.0
libtpu: 0.0.40
codegen_flags: <defaults>
</compile_context>

<pallas_src>
import functools

import jax
import jax.numpy as jnp
from jax.experimental import pallas as pl
from jax.experimental.pallas import tpu as pltpu

KD = KH = KW = 3   # conv kernel size
PAD = 1            # conv padding
EPS = 1e-5         # BatchNorm eps
LANE = 128


# ---------------------------------------------------------------------------
# Weight prep: block-banded matrix so the whole 3x3x3 conv over one depth
# slice becomes a single (H2, 9*CKp) x (9*CKp, W2*Cout) matmul.
# Row index  = (kd*3 + kh)*CKp + w2*Cin + ci   (w2 is the padded input column)
# Col index  = w*Cout + c                       (w is the output column)
# ---------------------------------------------------------------------------
def _build_banded_weights(w_oidhw, W2, ckp):
    cout, cin = w_oidhw.shape[0], w_oidhw.shape[1]
    wt = jnp.transpose(w_oidhw, (2, 3, 4, 1, 0)).astype(jnp.float32)  # (3,3,3,Cin,Cout)
    wi = jnp.arange(W2)
    segs = []
    for kd in range(KD):
        for kh in range(KH):
            seg = jnp.zeros((W2 + 2, cin, W2, cout), jnp.float32)
            for kw in range(KW):
                # seg[w + kw, :, w, :] = wt[kd, kh, kw]  for every output w
                seg = seg.at[wi + kw, :, wi, :].set(wt[kd, kh, kw])
            seg = seg.reshape((W2 + 2) * cin, W2 * cout)
            pad_rows = ckp - (W2 + 2) * cin
            if pad_rows:
                seg = jnp.pad(seg, ((0, pad_rows), (0, 0)))
            segs.append(seg)
    return jnp.concatenate(segs, axis=0)          # (9*CKp, W2*Cout)


# ---------------------------------------------------------------------------
# Kernel 1: conv as one matmul per (n, d) slice + BN-stat accumulation.
# ---------------------------------------------------------------------------
def _conv3d_kernel(x_ref, w_ref, b_ref, o_ref, sum_ref, ssq_ref, *, H2):
    # x_ref  : (1, D+2, H2+2, CKp)   padded upsampled sample, (W,Cin) on lanes
    # w_ref  : (9*CKp, W2*Cout)      block-banded weight matrix
    # b_ref  : (1, W2*Cout)          bias tiled over W2
    # o_ref  : (1, 1, H2, W2*Cout)   one depth slice, lane-dense
    # sum_ref, ssq_ref : (1, 1, W2*Cout)  per-sample stat accumulators
    d = pl.program_id(1)

    pieces = []
    for kd in range(KD):
        xs = x_ref[0, d + kd]                      # (H2+2, CKp)
        for kh in range(KH):
            pieces.append(xs[kh:kh + H2, :])       # (H2, CKp)
    lhs = jnp.concatenate(pieces, axis=-1)         # (H2, 9*CKp), 128-aligned concat

    acc = jnp.dot(lhs, w_ref[...], preferred_element_type=jnp.float32) + b_ref[...]
    o_ref[0, 0] = acc.astype(o_ref.dtype)          # full-width (16, 128) store

    @pl.when(d == 0)
    def _():
        sum_ref[...] = jnp.zeros_like(sum_ref)
        ssq_ref[...] = jnp.zeros_like(ssq_ref)

    sum_ref[0] += jnp.sum(acc, axis=0, keepdims=True)
    ssq_ref[0] += jnp.sum(acc * acc, axis=0, keepdims=True)


def conv3d_pallas(xf, w_banded, b_row, *, N, D, H2, W2, Cout):
    _, dp2, hp2, ckp = xf.shape
    k9 = w_banded.shape[0]
    wc = W2 * Cout
    kernel = functools.partial(_conv3d_kernel, H2=H2)
    return pl.pallas_call(
        kernel,
        out_shape=(
            jax.ShapeDtypeStruct((N, D, H2, wc), jnp.float32),   # conv output
            jax.ShapeDtypeStruct((N, 1, wc), jnp.float32),       # per-sample sum
            jax.ShapeDtypeStruct((N, 1, wc), jnp.float32),       # per-sample sum of sq
        ),
        grid_spec=pltpu.PrefetchScalarGridSpec(
            num_scalar_prefetch=0,
            grid=(N, D),
            in_specs=[
                pl.BlockSpec((1, dp2, hp2, ckp), lambda n, d: (n, 0, 0, 0)),
                pl.BlockSpec((k9, wc), lambda n, d: (0, 0)),
                pl.BlockSpec((1, wc), lambda n, d: (0, 0)),
            ],
            out_specs=(
                pl.BlockSpec((1, 1, H2, wc), lambda n, d: (n, d, 0, 0)),
                pl.BlockSpec((1, 1, wc), lambda n, d: (n, 0, 0)),
                pl.BlockSpec((1, 1, wc), lambda n, d: (n, 0, 0)),
            ),
        ),
        compiler_params=pltpu.CompilerParams(
            dimension_semantics=("parallel", "arbitrary"),
            vmem_limit_bytes=32 * 1024 * 1024,
        ),
    )(xf, w_banded, b_row)


# ---------------------------------------------------------------------------
# Kernel 2: fused affine normalization + ReLU, lane-dense (last dim = W2*Cout).
# ---------------------------------------------------------------------------
def _bn_relu_kernel(y_ref, scale_ref, shift_ref, o_ref):
    o_ref[...] = jnp.maximum(y_ref[...] * scale_ref[...] + shift_ref[...], 0.0)


def bn_relu_pallas(y2d, scale_row, shift_row, tile_rows=512):
    R, C = y2d.shape
    tile_rows = min(tile_rows, R)
    return pl.pallas_call(
        _bn_relu_kernel,
        out_shape=jax.ShapeDtypeStruct((R, C), jnp.float32),
        grid_spec=pltpu.PrefetchScalarGridSpec(
            num_scalar_prefetch=0,
            grid=(pl.cdiv(R, tile_rows),),
            in_specs=[
                pl.BlockSpec((tile_rows, C), lambda i: (i, 0)),
                pl.BlockSpec((1, C), lambda i: (0, 0)),
                pl.BlockSpec((1, C), lambda i: (0, 0)),
            ],
            out_specs=pl.BlockSpec((tile_rows, C), lambda i: (i, 0)),
        ),
        compiler_params=pltpu.CompilerParams(
            dimension_semantics=("parallel",),
            vmem_limit_bytes=32 * 1024 * 1024,
        ),
    )(y2d, scale_row, shift_row)


# ---------------------------------------------------------------------------
# Full UpBlock3d forward.
# ---------------------------------------------------------------------------
@jax.jit
def up_block_3d(x_ncdhw, w_oidhw, b, gamma, beta):
    n, cin, d, h, w = x_ncdhw.shape
    cout = w_oidhw.shape[0]
    h2, w2 = 2 * h, 2 * w

    # Nearest x2 upsample on H/W (depth unchanged), NCDHW -> NDHWC, zero pad 1.
    # TODO(synk): fuse the nearest upsample + zero-pad into the conv kernel
    # (index math on the original x) to remove these XLA HBM materializations.
    up = jnp.repeat(jnp.repeat(x_ncdhw, 2, axis=3), 2, axis=4)
    up_cl = jnp.transpose(up, (0, 2, 3, 4, 1))                     # (N,D,H2,W2,Cin)
    xp = jnp.pad(up_cl, ((0, 0), (1, 1), (1, 1), (1, 1), (0, 0)))

    # Fold (W2+2, Cin) onto the lane axis; pad lanes to a multiple of 128.
    ck = (w2 + 2) * cin
    ckp = ((ck + LANE - 1) // LANE) * LANE
    xf = xp.reshape(n, d + 2, h2 + 2, ck)
    if ckp != ck:
        xf = jnp.pad(xf, ((0, 0), (0, 0), (0, 0), (0, ckp - ck)))

    w_banded = _build_banded_weights(w_oidhw, w2, ckp)   # (9*CKp, W2*Cout)
    b_row = jnp.tile(b, w2)[None, :]                     # (1, W2*Cout)

    y, ssum, ssq = conv3d_pallas(xf, w_banded, b_row,
                                 N=n, D=d, H2=h2, W2=w2, Cout=cout)

    # BatchNorm3d training-mode batch stats from the in-kernel partial sums.
    count = n * d * h2 * w2
    mean = ssum.reshape(n, w2, cout).sum(axis=(0, 1)) / count
    ex2 = ssq.reshape(n, w2, cout).sum(axis=(0, 1)) / count
    var = jnp.maximum(ex2 - mean * mean, 0.0)
    scale = gamma * jax.lax.rsqrt(var + EPS)
    shift = beta - mean * scale

    o2 = bn_relu_pallas(
        y.reshape(n * d * h2, w2 * cout),
        jnp.tile(scale, w2)[None, :],
        jnp.tile(shift, w2)[None, :],
    )
    out_cl = o2.reshape(n, d, h2, w2, cout)
    return jnp.transpose(out_cl, (0, 4, 1, 2, 3))        # back to NCDHW


# ---------------------------------------------------------------------------
# Pure-JAX reference for verification.
# ---------------------------------------------------------------------------
def up_block_3d_ref(x_ncdhw, w_oidhw, b, gamma, beta):
    up = jnp.repeat(jnp.repeat(x_ncdhw, 2, axis=3), 2, axis=4)
    y = jax.lax.conv_general_dilated(
        up, w_oidhw, window_strides=(1, 1, 1),
        padding=((PAD, PAD), (PAD, PAD), (PAD, PAD)),
        dimension_numbers=("NCDHW", "OIDHW", "NCDHW"),
    ) + b[None, :, None, None, None]
    mean = jnp.mean(y, axis=(0, 2, 3, 4), keepdims=True)
    var = jnp.var(y, axis=(0, 2, 3, 4), keepdims=True)
    yn = (y - mean) / jnp.sqrt(var + EPS)
    yn = gamma[None, :, None, None, None] * yn + beta[None, :, None, None, None]
    return jnp.maximum(yn, 0.0)


if __name__ == "__main__":
    N, Cin, Cout = 2, 4, 8
    D, H, W = 4, 8, 8

    key = jax.random.PRNGKey(0)
    kx, kw_, kb, kg, kbeta = jax.random.split(key, 5)

    x = jax.random.normal(kx, (N, Cin, D, H, W), dtype=jnp.float32)
    w = 0.1 * jax.random.normal(kw_, (Cout, Cin, KD, KH, KW), dtype=jnp.float32)
    b = 0.1 * jax.random.normal(kb, (Cout,), dtype=jnp.float32)
    gamma = 1.0 + 0.1 * jax.random.normal(kg, (Cout,), dtype=jnp.float32)
    beta = 0.1 * jax.random.normal(kbeta, (Cout,), dtype=jnp.float32)

    out = jax.block_until_ready(up_block_3d(x, w, b, gamma, beta))
    ref = jax.block_until_ready(up_block_3d_ref(x, w, b, gamma, beta))

    assert out.shape == (N, Cout, D, 2 * H, 2 * W), out.shape
    assert jnp.allclose(out, ref, rtol=1e-4, atol=1e-4), float(
        jnp.max(jnp.abs(out - ref)))
    print("KERNEL_OK")
</pallas_src>

<mosaic_0001>
module attributes {stable_mosaic.version = 11 : i64} {
  func.func @_bn_relu_kernel(%arg0: i32, %arg1: memref<128x128xf32, #tpu.memory_space<vmem>>, %arg2: memref<1x128xf32, #tpu.memory_space<vmem>>, %arg3: memref<1x128xf32, #tpu.memory_space<vmem>>, %arg4: memref<128x128xf32, #tpu.memory_space<vmem>>) attributes {dimension_semantics = [#tpu.dimension_semantics<parallel>], iteration_bounds = array<i64: 1>, scalar_prefetch = 0 : i64, scratch_operands = 0 : i64, tpu.core_type = #tpu.core_type<tc>, window_params = [{transform_indices = @transform_0, window_bounds = array<i64: 128, 128>}, {pipeline_mode = #tpu.pipeline_mode<synchronous>, transform_indices = @transform_1, window_bounds = array<i64: 1, 128>}, {pipeline_mode = #tpu.pipeline_mode<synchronous>, transform_indices = @transform_2, window_bounds = array<i64: 1, 128>}, {transform_indices = @transform_3, window_bounds = array<i64: 128, 128>}]} {
    %c0 = arith.constant 0 : index
    %c0_0 = arith.constant 0 : index
    %0 = vector.load %arg1[%c0, %c0_0] : memref<128x128xf32, #tpu.memory_space<vmem>>, vector<128x128xf32>
    %c0_1 = arith.constant 0 : index
    %c0_2 = arith.constant 0 : index
    %1 = vector.load %arg2[%c0_1, %c0_2] : memref<1x128xf32, #tpu.memory_space<vmem>>, vector<1x128xf32>
    %2 = vector.broadcast %1 : vector<1x128xf32> to vector<128x128xf32>
    %3 = arith.mulf %0, %2 : vector<128x128xf32>
    %c0_3 = arith.constant 0 : index
    %c0_4 = arith.constant 0 : index
    %4 = vector.load %arg3[%c0_3, %c0_4] : memref<1x128xf32, #tpu.memory_space<vmem>>, vector<1x128xf32>
    %5 = vector.broadcast %4 : vector<1x128xf32> to vector<128x128xf32>
    %6 = arith.addf %3, %5 : vector<128x128xf32>
    %cst = arith.constant 0.000000e+00 : f32
    %7 = vector.broadcast %cst : f32 to vector<128x128xf32>
    %8 = arith.maximumf %6, %7 : vector<128x128xf32>
    %c0_5 = arith.constant 0 : index
    %c0_6 = arith.constant 0 : index
    %9 = vector.load %arg4[%c0_5, %c0_6] : memref<128x128xf32, #tpu.memory_space<vmem>>, vector<128x128xf32>
    tpu.vector_store %arg4[%c0_5, %c0_6], %8 {strides = array<i32>} : memref<128x128xf32, #tpu.memory_space<vmem>>, vector<128x128xf32>,
    return
  }
  func.func @transform_0(%arg0: i32) -> (i32, i32) {
    %c0_i32 = arith.constant 0 : i32
    %c0_i32_0 = arith.constant 0 : i32
    return %arg0, %c0_i32 : i32, i32
  }
  func.func @transform_1(%arg0: i32) -> (i32, i32) {
    %c0_i32 = arith.constant 0 : i32
    %c0_i32_0 = arith.constant 0 : i32
    %c0_i32_1 = arith.constant 0 : i32
    return %c0_i32, %c0_i32_0 : i32, i32
  }
  func.func @transform_2(%arg0: i32) -> (i32, i32) {
    %c0_i32 = arith.constant 0 : i32
    %c0_i32_0 = arith.constant 0 : i32
    %c0_i32_1 = arith.constant 0 : i32
    return %c0_i32, %c0_i32_0 : i32, i32
  }
  func.func @transform_3(%arg0: i32) -> (i32, i32) {
    %c0_i32 = arith.constant 0 : i32
    %c0_i32_0 = arith.constant 0 : i32
    return %arg0, %c0_i32 : i32, i32
  }
}

module attributes {stable_mosaic.version = 11 : i64} {
  func.func @_conv3d_kernel(%arg0: i32, %arg1: i32, %arg2: memref<1x6x18x128xf32, #tpu.memory_space<vmem>>, %arg3: memref<1152x128xf32, #tpu.memory_space<vmem>>, %arg4: memref<1x128xf32, #tpu.memory_space<vmem>>, %arg5: memref<1x1x16x128xf32, #tpu.memory_space<vmem>>, %arg6: memref<1x1x128xf32, #tpu.memory_space<vmem>>, %arg7: memref<1x1x128xf32, #tpu.memory_space<vmem>>) attributes {dimension_semantics = [#tpu.dimension_semantics<parallel>, #tpu.dimension_semantics<arbitrary>], iteration_bounds = array<i64: 2, 4>, scalar_prefetch = 0 : i64, scratch_operands = 0 : i64, tpu.core_type = #tpu.core_type<tc>, window_params = [{transform_indices = @transform_0, window_bounds = array<i64: 1, 6, 18, 128>}, {pipeline_mode = #tpu.pipeline_mode<synchronous>, transform_indices = @transform_1, window_bounds = array<i64: 1152, 128>}, {pipeline_mode = #tpu.pipeline_mode<synchronous>, transform_indices = @transform_2, window_bounds = array<i64: 1, 128>}, {transform_indices = @transform_3, window_bounds = array<i64: 1, 1, 16, 128>}, {transform_indices = @transform_4, window_bounds = array<i64: 1, 1, 128>}, {transform_indices = @transform_5, window_bounds = array<i64: 1, 1, 128>}]} {
    %c0_i32 = arith.constant 0 : i32
    %0 = arith.addi %arg1, %c0_i32 : i32
    %c0 = arith.constant 0 : index
    %1 = arith.index_cast %0 : i32 to index
    %c0_0 = arith.constant 0 : index
    %c0_1 = arith.constant 0 : index
    %2 = vector.load %arg2[%c0, %1, %c0_0, %c0_1] : memref<1x6x18x128xf32, #tpu.memory_space<vmem>>, vector<1x1x18x128xf32>
    %3 = vector.shape_cast %2 : vector<1x1x18x128xf32> to vector<18x128xf32>
    %4 = vector.extract_strided_slice %3 {offsets = [0, 0], sizes = [16, 128], strides = [1, 1]} : vector<18x128xf32> to vector<16x128xf32>
    %5 = vector.extract_strided_slice %3 {offsets = [1, 0], sizes = [16, 128], strides = [1, 1]} : vector<18x128xf32> to vector<16x128xf32>
    %6 = vector.extract_strided_slice %3 {offsets = [2, 0], sizes = [16, 128], strides = [1, 1]} : vector<18x128xf32> to vector<16x128xf32>
    %c1_i32 = arith.constant 1 : i32
    %7 = arith.addi %arg1, %c1_i32 : i32
    %c0_2 = arith.constant 0 : index
    %8 = arith.index_cast %7 : i32 to index
    %c0_3 = arith.constant 0 : index
    %c0_4 = arith.constant 0 : index
    %9 = vector.load %arg2[%c0_2, %8, %c0_3, %c0_4] : memref<1x6x18x128xf32, #tpu.memory_space<vmem>>, vector<1x1x18x128xf32>
    %10 = vector.shape_cast %9 : vector<1x1x18x128xf32> to vector<18x128xf32>
    %11 = vector.extract_strided_slice %10 {offsets = [0, 0], sizes = [16, 128], strides = [1, 1]} : vector<18x128xf32> to vector<16x128xf32>
    %12 = vector.extract_strided_slice %10 {offsets = [1, 0], sizes = [16, 128], strides = [1, 1]} : vector<18x128xf32> to vector<16x128xf32>
    %13 = vector.extract_strided_slice %10 {offsets = [2, 0], sizes = [16, 128], strides = [1, 1]} : vector<18x128xf32> to vector<16x128xf32>
    %c2_i32 = arith.constant 2 : i32
    %14 = arith.addi %arg1, %c2_i32 : i32
    %c0_5 = arith.constant 0 : index
    %15 = arith.index_cast %14 : i32 to index
    %c0_6 = arith.constant 0 : index
    %c0_7 = arith.constant 0 : index
    %16 = vector.load %arg2[%c0_5, %15, %c0_6, %c0_7] : memref<1x6x18x128xf32, #tpu.memory_space<vmem>>, vector<1x1x18x128xf32>
    %17 = vector.shape_cast %16 : vector<1x1x18x128xf32> to vector<18x128xf32>
    %18 = vector.extract_strided_slice %17 {offsets = [0, 0], sizes = [16, 128], strides = [1, 1]} : vector<18x128xf32> to vector<16x128xf32>
    %19 = vector.extract_strided_slice %17 {offsets = [1, 0], sizes = [16, 128], strides = [1, 1]} : vector<18x128xf32> to vector<16x128xf32>
    %20 = vector.extract_strided_slice %17 {offsets = [2, 0], sizes = [16, 128], strides = [1, 1]} : vector<18x128xf32> to vector<16x128xf32>
    %21 = tpu.concatenate %4, %5, %6, %11, %12, %13, %18, %19, %20 in 1 : vector<16x128xf32>, vector<16x128xf32>, vector<16x128xf32>, vector<16x128xf32>, vector<16x128xf32>, vector<16x128xf32>, vector<16x128xf32>, vector<16x128xf32>, vector<16x128xf32> -> vector<16x1152xf32>
    %c0_8 = arith.constant 0 : index
    %c0_9 = arith.constant 0 : index
    %22 = vector.load %arg3[%c0_8, %c0_9] : memref<1152x128xf32, #tpu.memory_space<vmem>>, vector<1152x128xf32>
    %cst = arith.constant dense<0.000000e+00> : vector<16x128xf32>
    %23 = tpu.matmul %21, %22, %cst {dimension_numbers = #tpu.dot_dimension_numbers<[1], [0], [0], [1], [0, 0, 1, 1], [], []>} : vector<16x1152xf32>, vector<1152x128xf32>, vector<16x128xf32> -> vector<16x128xf32>
    %c0_10 = arith.constant 0 : index
    %c0_11 = arith.constant 0 : index
    %24 = vector.load %arg4[%c0_10, %c0_11] : memref<1x128xf32, #tpu.memory_space<vmem>>, vector<1x128xf32>
    %25 = vector.broadcast %24 : vector<1x128xf32> to vector<16x128xf32>
    %26 = arith.addf %23, %25 : vector<16x128xf32>
    %c0_12 = arith.constant 0 : index
    %c0_13 = arith.constant 0 : index
    %c0_14 = arith.constant 0 : index
    %c0_15 = arith.constant 0 : index
    %27 = vector.load %arg5[%c0_12, %c0_13, %c0_14, %c0_15] : memref<1x1x16x128xf32, #tpu.memory_space<vmem>>, vector<1x1x16x128xf32>
    %28 = vector.shape_cast %27 : vector<1x1x16x128xf32> to vector<16x128xf32>
    %29 = vector.shape_cast %26 : vector<16x128xf32> to vector<1x1x16x128xf32>
    tpu.vector_store %arg5[%c0_12, %c0_13, %c0_14, %c0_15], %29 {strides = array<i32>} : memref<1x1x16x128xf32, #tpu.memory_space<vmem>>, vector<1x1x16x128xf32>,
    %c0_i32_16 = arith.constant 0 : i32
    %30 = arith.cmpi eq, %arg1, %c0_i32_16 : i32
    %31 = arith.extui %30 : i1 to i32
    %c0_i32_17 = arith.constant 0 : i32
    %32 = arith.cmpi ne, %31, %c0_i32_17 : i32
    scf.if %32 {
      %cst_32 = arith.constant 0.000000e+00 : f32
      %50 = vector.broadcast %cst_32 : f32 to vector<1x1x128xf32>
      %c0_33 = arith.constant 0 : index
      %c0_34 = arith.constant 0 : index
      %c0_35 = arith.constant 0 : index
      %51 = vector.load %arg6[%c0_33, %c0_34, %c0_35] : memref<1x1x128xf32, #tpu.memory_space<vmem>>, vector<1x1x128xf32>
      tpu.vector_store %arg6[%c0_33, %c0_34, %c0_35], %50 {strides = array<i32>} : memref<1x1x128xf32, #tpu.memory_space<vmem>>, vector<1x1x128xf32>,
      %cst_36 = arith.constant 0.000000e+00 : f32
      %52 = vector.broadcast %cst_36 : f32 to vector<1x1x128xf32>
      %c0_37 = arith.constant 0 : index
      %c0_38 = arith.constant 0 : index
      %c0_39 = arith.constant 0 : index
      %53 = vector.load %arg7[%c0_37, %c0_38, %c0_39] : memref<1x1x128xf32, #tpu.memory_space<vmem>>, vector<1x1x128xf32>
      tpu.vector_store %arg7[%c0_37, %c0_38, %c0_39], %52 {strides = array<i32>} : memref<1x1x128xf32, #tpu.memory_space<vmem>>, vector<1x1x128xf32>,
    } else {
    }
    %c0_18 = arith.constant 0 : index
    %c0_19 = arith.constant 0 : index
    %c0_20 = arith.constant 0 : index
    %33 = vector.load %arg6[%c0_18, %c0_19, %c0_20] : memref<1x1x128xf32, #tpu.memory_space<vmem>>, vector<1x1x128xf32>
    %34 = vector.shape_cast %33 : vector<1x1x128xf32> to vector<1x128xf32>
    %cst_21 = arith.constant dense<0.000000e+00> : vector<128xf32>
    %35 = vector.multi_reduction <add>, %26, %cst_21 [0] : vector<16x128xf32> to vector<128xf32>
    %36 = vector.shape_cast %35 : vector<128xf32> to vector<1x128xf32>
    %37 = arith.addf %34, %36 : vector<1x128xf32>
    %c0_22 = arith.constant 0 : index
    %c0_23 = arith.constant 0 : index
    %c0_24 = arith.constant 0 : index
    %38 = vector.load %arg6[%c0_22, %c0_23, %c0_24] : memref<1x1x128xf32, #tpu.memory_space<vmem>>, vector<1x1x128xf32>
    %39 = vector.shape_cast %38 : vector<1x1x128xf32> to vector<1x128xf32>
    %40 = vector.shape_cast %37 : vector<1x128xf32> to vector<1x1x128xf32>
    tpu.vector_store %arg6[%c0_22, %c0_23, %c0_24], %40 {strides = array<i32>} : memref<1x1x128xf32, #tpu.memory_space<vmem>>, vector<1x1x128xf32>,
    %c0_25 = arith.constant 0 : index
    %c0_26 = arith.constant 0 : index
    %c0_27 = arith.constant 0 : index
    %41 = vector.load %arg7[%c0_25, %c0_26, %c0_27] : memref<1x1x128xf32, #tpu.memory_space<vmem>>, vector<1x1x128xf32>
    %42 = vector.shape_cast %41 : vector<1x1x128xf32> to vector<1x128xf32>
    %43 = arith.mulf %26, %26 : vector<16x128xf32>
    %cst_28 = arith.constant dense<0.000000e+00> : vector<128xf32>
    %44 = vector.multi_reduction <add>, %43, %cst_28 [0] : vector<16x128xf32> to vector<128xf32>
    %45 = vector.shape_cast %44 : vector<128xf32> to vector<1x128xf32>
    %46 = arith.addf %42, %45 : vector<1x128xf32>
    %c0_29 = arith.constant 0 : index
    %c0_30 = arith.constant 0 : index
    %c0_31 = arith.constant 0 : index
    %47 = vector.load %arg7[%c0_29, %c0_30, %c0_31] : memref<1x1x128xf32, #tpu.memory_space<vmem>>, vector<1x1x128xf32>
    %48 = vector.shape_cast %47 : vector<1x1x128xf32> to vector<1x128xf32>
    %49 = vector.shape_cast %46 : vector<1x128xf32> to vector<1x1x128xf32>
    tpu.vector_store %arg7[%c0_29, %c0_30, %c0_31], %49 {strides = array<i32>} : memref<1x1x128xf32, #tpu.memory_space<vmem>>, vector<1x1x128xf32>,
    return
  }
  func.func @transform_0(%arg0: i32, %arg1: i32) -> (i32, i32, i32, i32) {
    %c0_i32 = arith.constant 0 : i32
    %c0_i32_0 = arith.constant 0 : i32
    %c0_i32_1 = arith.constant 0 : i32
    %c0_i32_2 = arith.constant 0 : i32
    return %arg0, %c0_i32, %c0_i32_0, %c0_i32_1 : i32, i32, i32, i32
  }
  func.func @transform_1(%arg0: i32, %arg1: i32) -> (i32, i32) {
    %c0_i32 = arith.constant 0 : i32
    %c0_i32_0 = arith.constant 0 : i32
    %c0_i32_1 = arith.constant 0 : i32
    return %c0_i32, %c0_i32_0 : i32, i32
  }
  func.func @transform_2(%arg0: i32, %arg1: i32) -> (i32, i32) {
    %c0_i32 = arith.constant 0 : i32
    %c0_i32_0 = arith.constant 0 : i32
    %c0_i32_1 = arith.constant 0 : i32
    return %c0_i32, %c0_i32_0 : i32, i32
  }
  func.func @transform_3(%arg0: i32, %arg1: i32) -> (i32, i32, i32, i32) {
    %c0_i32 = arith.constant 0 : i32
    %c0_i32_0 = arith.constant 0 : i32
    %c0_i32_1 = arith.constant 0 : i32
    return %arg0, %arg1, %c0_i32, %c0_i32_0 : i32, i32, i32, i32
  }
  func.func @transform_4(%arg0: i32, %arg1: i32) -> (i32, i32, i32) {
    %c0_i32 = arith.constant 0 : i32
    %c0_i32_0 = arith.constant 0 : i32
    %c0_i32_1 = arith.constant 0 : i32
    return %arg0, %c0_i32, %c0_i32_0 : i32, i32, i32
  }
  func.func @transform_5(%arg0: i32, %arg1: i32) -> (i32, i32, i32) {
    %c0_i32 = arith.constant 0 : i32
    %c0_i32_0 = arith.constant 0 : i32
    %c0_i32_1 = arith.constant 0 : i32
    return %arg0, %c0_i32, %c0_i32_0 : i32, i32, i32
  }
}

</mosaic_0001>

<llo_original>
// kernel: tile.18
$region0: #{tile.18}
  #allocation0 [shape = 's32[1]{0}', space=sflag, size = 0x4, scoped, tag = 'scoped memory for tile.18']
  %s0 = inlined_call_operand.vmem [shape: f32[8], index: 0, kind: input, shape index: {}]
  %s1 = inlined_call_operand.vmem [shape: f32[16,8], index: 1, kind: output, shape index: {}]
  // Predicated region
  $region2: #{tile.18} parent=0 // pred_check
    _
  $region3: #{tile.18} parent=0 // pred_check_branch
    %3 = sbr.rel (0) target = $region5
  $region4: #{tile.18} parent=0 // pred_region
    _
  $region5: #{tile.18} parent=0 // pred_fallthru
    _
  %v4 = vld [vmem:[%s0] ss:$0 sm:$0xff]
  %5 = vst [vmem:[%s1] sm:$0xff] %v4
  %s6 = scalar_lea.vmem %s1, 8
  %7 = vst [vmem:[%s6] sm:$0xff] %v4

// kernel: tile.19
$region0: #{tile.19}
  %s0 = inlined_call_operand.vmem [shape: f32[16,8], index: 0, kind: input, shape index: {}]
  %s1 = inlined_call_operand.vmem [shape: f32[1,128], index: 1, kind: output, shape index: {}]
  $region1: #{tile.19} parent=0
    #allocation0 [shape = 'u8[4096]{0}', space=vmem, size = 0x1000, scoped, tag = 'scoped mem for output reshape']
    %v2 = vld [vmem:[%s0] sm:$0x1]
    %vm3 = vcmask 64512
    %4 = vst.msk [vmem:[#allocation0] sm:$0x1] %vm3, %v2
    %s5 = scalar_lea.vmem %s0, 15
    %v6 = vld [vmem:[%s5] sm:$0x1]
    %7 = vrot.lane.b32.xlu0 %v6, 120
    %v8 = vpop.permute.xlu0 %7
    %vm9 = vcmask 1048512
    %10 = vst.msk [vmem:[#allocation0] sm:$0x1] %vm9, %v8
    %s11 = scalar_lea.vmem %s0, 14
    %v12 = vld [vmem:[%s11] sm:$0x1]
    %13 = vrot.lane.b32.xlu0 %v12, 112
    %v14 = vpop.permute.xlu0 %13
    %vm15 = vcmask 982912
    %16 = vst.msk [vmem:[#allocation0] sm:$0x1] %vm15, %v14
    %s17 = scalar_lea.vmem %s0, 13
    %v18 = vld [vmem:[%s17] sm:$0x1]
    %19 = vrot.lane.b32.xlu0 %v18, 104
    %v20 = vpop.permute.xlu0 %19
    %vm21 = vcmask 917312
    %22 = vst.msk [vmem:[#allocation0] sm:$0x1] %vm21, %v20
    %s23 = scalar_lea.vmem %s0, 12
    %v24 = vld [vmem:[%s23] sm:$0x1]
    %25 = vrot.lane.b32.xlu0 %v24, 96
    %v26 = vpop.permute.xlu0 %25
    %vm27 = vcmask 851712
    %28 = vst.msk [vmem:[#allocation0] sm:$0x1] %vm27, %v26
    %s29 = scalar_lea.vmem %s0, 11
    %v30 = vld [vmem:[%s29] sm:$0x1]
    %31 = vrot.lane.b32.xlu0 %v30, 88
    %v32 = vpop.permute.xlu0 %31
    %vm33 = vcmask 786112
    %34 = vst.msk [vmem:[#allocation0] sm:$0x1] %vm33, %v32
    %s35 = scalar_lea.vmem %s0, 10
    %v36 = vld [vmem:[%s35] sm:$0x1]
    %37 = vrot.lane.b32.xlu0 %v36, 80
    %v38 = vpop.permute.xlu0 %37
    %vm39 = vcmask 720512
    %40 = vst.msk [vmem:[#allocation0] sm:$0x1] %vm39, %v38
    %s41 = scalar_lea.vmem %s0, 9
    %v42 = vld [vmem:[%s41] sm:$0x1]
    %43 = vrot.lane.b32.xlu0 %v42, 72
    %v44 = vpop.permute.xlu0 %43
    %vm45 = vcmask 654912
    %46 = vst.msk [vmem:[#allocation0] sm:$0x1] %vm45, %v44
    %s47 = scalar_lea.vmem %s0, 8
    %v48 = vld [vmem:[%s47] sm:$0x1]
    %49 = vrot.lane.b32.xlu0 %v48, 64
    %v50 = vpop.permute.xlu0 %49
    %vm51 = vcmask 589312
    %52 = vst.msk [vmem:[#allocation0] sm:$0x1] %vm51, %v50
    %s53 = scalar_lea.vmem %s0, 7
    %v54 = vld [vmem:[%s53] sm:$0x1]
    %55 = vrot.lane.b32.xlu0 %v54, 56
    %v56 = vpop.permute.xlu0 %55
    %vm57 = vcmask 523712
    %58 = vst.msk [vmem:[#allocation0] sm:$0x1] %vm57, %v56
    %s59 = scalar_lea.vmem %s0, 6
    %v60 = vld [vmem:[%s59] sm:$0x1]
    %61 = vrot.lane.b32.xlu0 %v60, 48
    %v62 = vpop.permute.xlu0 %61
    %vm63 = vcmask 458112
    %64 = vst.msk [vmem:[#allocation0] sm:$0x1] %vm63, %v62
    %s65 = scalar_lea.vmem %s0, 5
    %v66 = vld [vmem:[%s65] sm:$0x1]
    %67 = vrot.lane.b32.xlu0 %v66, 40
    %v68 = vpop.permute.xlu0 %67
    %vm69 = vcmask 392512
    %70 = vst.msk [vmem:[#allocation0] sm:$0x1] %vm69, %v68
    %s71 = scalar_lea.vmem %s0, 4
    %v72 = vld [vmem:[%s71] sm:$0x1]
    %73 = vrot.lane.b32.xlu0 %v72, 32
    %v74 = vpop.permute.xlu0 %73
    %vm75 = vcmask 326912
    %76 = vst.msk [vmem:[#allocation0] sm:$0x1] %vm75, %v74
    %s77 = scalar_lea.vmem %s0, 3
    %v78 = vld [vmem:[%s77] sm:$0x1]
    %79 = vrot.lane.b32.xlu0 %v78, 24
    %v80 = vpop.permute.xlu0 %79
    %vm81 = vcmask 261312
    %82 = vst.msk [vmem:[#allocation0] sm:$0x1] %vm81, %v80
    %s83 = scalar_lea.vmem %s0, 2
    %v84 = vld [vmem:[%s83] sm:$0x1]
    %85 = vrot.lane.b32.xlu0 %v84, 16
    %v86 = vpop.permute.xlu0 %85
    %vm87 = vcmask 195712
    %88 = vst.msk [vmem:[#allocation0] sm:$0x1] %vm87, %v86
    %s89 = scalar_lea.vmem %s0, 1
    %v90 = vld [vmem:[%s89] sm:$0x1]
    %91 = vrot.lane.b32.xlu0 %v90, 8
    %v92 = vpop.permute.xlu0 %91
    %vm93 = vcmask 130112
    %94 = vst.msk [vmem:[#allocation0] sm:$0x1] %vm93, %v92
    %s96 = sshllo.u32 0, 1
    %v98 = vld [vmem:[#allocation0] sm:%s96]
    %s99 = sshllo.u32 0, 1
    %100 = vst [vmem:[%s1] sm:%s99] %v98

// kernel: up_block_3d.3
$region0: #{up_block_3d.3}
  #allocation0 [shape = 'u32[]', space=smem, size = 0x4, offset = 0x4, fixed_abs, tag = 'smem constant byte address 0x4 - core index']
  #allocation1 [shape = 'u32[144,128]{1,0:T(1,128)}', space=vmem, size = 0x12000, scoped, tag = 'internal scratch']
  %s0 = inlined_call_operand.vmem [shape: f32[128,128], index: 0, kind: input, shape index: {}]
  %s1 = inlined_call_operand.vmem [shape: f32[1,128], index: 1, kind: input, shape index: {}]
  %s2 = inlined_call_operand.vmem [shape: f32[1,128], index: 2, kind: input, shape index: {}]
  %s3 = inlined_call_operand.vmem [shape: f32[128,128], index: 3, kind: output, shape index: {}]
  %s4 = sld [smem:[#allocation0]]
  $region22: #{up_block_3d.3} parent=0
    _
  %s6 = ssub.s32 1, %s4
  %s7 = scalar_select 0, %s6, %s4
  // Predicated region
  $region2: #{up_block_3d.3} parent=0 // pred_check
    _
  $region3: #{up_block_3d.3} parent=0 // pred_check_branch
    %9 = sbr.rel (0) target = $region5
  $region4: #{up_block_3d.3} parent=0 // pred_region
    _
  $region5: #{up_block_3d.3} parent=0 // pred_fallthru
    _
  // Predicated region
  $region6: #{up_block_3d.3} parent=0 // pred_check
    _
  $region7: #{up_block_3d.3} parent=0 // pred_check_branch
    %11 = sbr.rel (0) target = $region9
  $region8: #{up_block_3d.3} parent=0 // pred_region
    _
  $region9: #{up_block_3d.3} parent=0 // pred_fallthru
    _
  // Predicated region
  $region10: #{up_block_3d.3} parent=0 // pred_check
    _
  $region11: #{up_block_3d.3} parent=0 // pred_check_branch
    %13 = sbr.rel (0) target = $region13
  $region12: #{up_block_3d.3} parent=0 // pred_region
    _
  $region13: #{up_block_3d.3} parent=0 // pred_fallthru
    _
  %v14 = vld [vmem:[%s0] sm:$0xff]
  %v15 = vld [vmem:[%s0 + $0x8] sm:$0xff]
  %v16 = vld [vmem:[%s0 + $0x10] sm:$0xff]
  %v17 = vld [vmem:[%s0 + $0x18] sm:$0xff]
  %v18 = vld [vmem:[%s0 + $0x20] sm:$0xff]
  %v19 = vld [vmem:[%s0 + $0x28] sm:$0xff]
  %v20 = vld [vmem:[%s0 + $0x30] sm:$0xff]
  %v21 = vld [vmem:[%s0 + $0x38] sm:$0xff]
  %v22 = vld [vmem:[%s0 + $0x40] sm:$0xff]
  %v23 = vld [vmem:[%s0 + $0x48] sm:$0xff]
  %v24 = vld [vmem:[%s0 + $0x50] sm:$0xff]
  %v25 = vld [vmem:[%s0 + $0x58] sm:$0xff]
  %v26 = vld [vmem:[%s0 + $0x60] sm:$0xff]
  %v27 = vld [vmem:[%s0 + $0x68] sm:$0xff]
  %v28 = vld [vmem:[%s0 + $0x70] sm:$0xff]
  %v29 = vld [vmem:[%s0 + $0x78] sm:$0xff]
  %v30 = vld [vmem:[%s1] sm:$0x1]
  %v32 = vlaneseq
  %v33 = vshrl.u32 %v32, 7
  %v34 = vsub.s32 0, %v33
  %v35 = vrot.slane %v30, %v34
  %v37 = vmul.f32 %v14, %v35
  %v38 = vmul.f32 %v15, %v35
  %v39 = vmul.f32 %v16, %v35
  %v40 = vmul.f32 %v17, %v35
  %v41 = vmul.f32 %v18, %v35
  %v42 = vmul.f32 %v19, %v35
  %v43 = vmul.f32 %v20, %v35
  %v44 = vmul.f32 %v21, %v35
  %v45 = vmul.f32 %v22, %v35
  %v46 = vmul.f32 %v23, %v35
  %v47 = vmul.f32 %v24, %v35
  %v48 = vmul.f32 %v25, %v35
  %v49 = vmul.f32 %v26, %v35
  %v50 = vmul.f32 %v27, %v35
  %v51 = vmul.f32 %v28, %v35
  %v52 = vmul.f32 %v29, %v35
  %v53 = vld [vmem:[%s2] sm:$0x1]
  %v55 = vlaneseq
  %v56 = vshrl.u32 %v55, 7
  %v57 = vsub.s32 0, %v56
  %v58 = vrot.slane %v53, %v57
  %v60 = vadd.f32 %v37, %v58
  %v61 = vadd.f32 %v38, %v58
  %v62 = vadd.f32 %v39, %v58
  %v63 = vadd.f32 %v40, %v58
  %v64 = vadd.f32 %v41, %v58
  %v65 = vadd.f32 %v42, %v58
  %v66 = vadd.f32 %v43, %v58
  %v67 = vadd.f32 %v44, %v58
  %v68 = vadd.f32 %v45, %v58
  %v69 = vadd.f32 %v46, %v58
  %v70 = vadd.f32 %v47, %v58
  %v71 = vadd.f32 %v48, %v58
  %v72 = vadd.f32 %v49, %v58
  %v73 = vadd.f32 %v50, %v58
  %v74 = vadd.f32 %v51, %v58
  %v75 = vadd.f32 %v52, %v58
  %v76 = vmax.f32 %v60, 0.0
  %v77 = vmax.f32 %v61, 0.0
  %v78 = vmax.f32 %v62, 0.0
  %v79 = vmax.f32 %v63, 0.0
  %v80 = vmax.f32 %v64, 0.0
  %v81 = vmax.f32 %v65, 0.0
  %v82 = vmax.f32 %v66, 0.0
  %v83 = vmax.f32 %v67, 0.0
  %v84 = vmax.f32 %v68, 0.0
  %v85 = vmax.f32 %v69, 0.0
  %v86 = vmax.f32 %v70, 0.0
  %v87 = vmax.f32 %v71, 0.0
  %v88 = vmax.f32 %v72, 0.0
  %v89 = vmax.f32 %v73, 0.0
  %v90 = vmax.f32 %v74, 0.0
  %v91 = vmax.f32 %v75, 0.0
  %92 = vst [vmem:[%s3] sm:$0xff] %v76
  %93 = vst [vmem:[%s3 + $0x8] sm:$0xff] %v77
  %94 = vst [vmem:[%s3 + $0x10] sm:$0xff] %v78
  %95 = vst [vmem:[%s3 + $0x18] sm:$0xff] %v79
  %96 = vst [vmem:[%s3 + $0x20] sm:$0xff] %v80
  %97 = vst [vmem:[%s3 + $0x28] sm:$0xff] %v81
  %98 = vst [vmem:[%s3 + $0x30] sm:$0xff] %v82
  %99 = vst [vmem:[%s3 + $0x38] sm:$0xff] %v83
  %100 = vst [vmem:[%s3 + $0x40] sm:$0xff] %v84
  %101 = vst [vmem:[%s3 + $0x48] sm:$0xff] %v85
  %102 = vst [vmem:[%s3 + $0x50] sm:$0xff] %v86
  %103 = vst [vmem:[%s3 + $0x58] sm:$0xff] %v87
  %104 = vst [vmem:[%s3 + $0x60] sm:$0xff] %v88
  %105 = vst [vmem:[%s3 + $0x68] sm:$0xff] %v89
  %106 = vst [vmem:[%s3 + $0x70] sm:$0xff] %v90
  %107 = vst [vmem:[%s3 + $0x78] sm:$0xff] %v91
  // Predicated region
  $region14: #{up_block_3d.3} parent=0 // pred_check
    _
  $region15: #{up_block_3d.3} parent=0 // pred_check_branch
    %109 = sbr.rel (0) target = $region17
  $region16: #{up_block_3d.3} parent=0 // pred_region
    _
  $region17: #{up_block_3d.3} parent=0 // pred_fallthru
    _
  // Predicated region
  $region18: #{up_block_3d.3} parent=0 // pred_check
    _
  $region19: #{up_block_3d.3} parent=0 // pred_check_branch
    %111 = sbr.rel (0) target = $region21
  $region20: #{up_block_3d.3} parent=0 // pred_region
    _
  $region21: #{up_block_3d.3} parent=0 // pred_fallthru
    _

// kernel: up_block_3d.2
$region0: #{up_block_3d.2}
  #allocation0 [shape = 'u32[]', space=smem, size = 0x4, offset = 0x4, fixed_abs, tag = 'smem constant byte address 0x4 - core index']
  #allocation1 [shape = 'u32[144,128]{1,0:T(1,128)}', space=vmem, size = 0x12000, scoped, tag = 'internal scratch']
  %s0 = inlined_call_operand.vmem [shape: f32[2,6,18,128], index: 0, kind: input, shape index: {}]
  %s1 = inlined_call_operand.vmem [shape: f32[1152,128], index: 1, kind: input, shape index: {}]
  %s2 = inlined_call_operand.vmem [shape: f32[1,128], index: 2, kind: input, shape index: {}]
  %s3 = inlined_call_operand.vmem [shape: f32[2,4,16,128], index: 3, kind: output, shape index: {0}]
  %s4 = inlined_call_operand.vmem [shape: f32[2,1,128], index: 4, kind: output, shape index: {1}]
  %s5 = inlined_call_operand.vmem [shape: f32[2,1,128], index: 5, kind: output, shape index: {2}]
  %6 = xla_tuple %s3, %s4, %s5
  %s7 = sld [smem:[#allocation0]]
  $region65: #{up_block_3d.2} parent=0
    _
  %s9 = ssub.s32 1, %s7
  %s10 = scalar_select 0, %s9, %s7
  loop: start=0, step=1, limit=10
  $region2: #{up_block_3d.2} parent=0 // loop_pre_header
    _
  $region3: #{up_block_3d.2} parent=0 // loop_header
    %s12 = sphi 0, %s16
    %p13 = scmp.ge.s32.totalorder %s12, 10
    %s19 = sphi 0, %s31
    %s20 = sphi 0, %s27
    %s21 = sphi 0, %s19
    %s22 = sphi 0, %s20
    %s23 = sphi 0, %s21
    %s24 = sphi 0, %s22
    %s34 = sphi 0, %s36
    %s37 = sphi 0, %s34
    %s38 = sphi 0, %s37
    %s54 = sphi 0, %s38
    %s58 = sphi 0, %s58
    %s60 = sphi 0, %s58
    %s61 = sphi 0, %s60
    %s75 = sphi 0, %s61
    %s79 = sphi 0, %s79
    %s81 = sphi 0, %s79
    %s82 = sphi 0, %s81
    %s96 = sphi 0, %s82
    %s104 = sphi 0, %s106
    %s107 = sphi 0, %s104
    %s108 = sphi 0, %s107
    %s124 = sphi 0, %s108
    %s130 = sphi 0, %s132
    %s133 = sphi 0, %s130
    %s134 = sphi 0, %s133
    %s150 = sphi 0, %s134
    %s156 = sphi 0, %s158
    %s159 = sphi 0, %s156
    %s160 = sphi 0, %s159
    %s176 = sphi 0, %s160
  $region4: #{up_block_3d.2} parent=0 // loop_header_branch
    %15 = sbr.rel (%p13) target = $region8
  $region5: #{up_block_3d.2} parent=0 // loop_body
    %s17 = ssub.s32 %s12, 1
    %s18 = ssub.s32 %s12, 2
    %s25 = sadd.s32 1, %s20
    %p26 = scmp.ge.s32.totalorder %s25, 4
    %s27 = scalar_select %p26, 0, %s25
    %s28 = sadd.s32 1, %s19
    %s29 = scalar_select %p26, %s28, %s19
    %p30 = scmp.ge.s32.totalorder %s29, 2
    %s31 = scalar_select %p30, 0, %s29
    %s32 = ssub.s32 %s19, %s31
    %p33 = scmp.eq.s32.totalorder %s32, 0
    %s35 = sadd.s32 %s34, 1
    %s36 = scalar_select %p33, %s34, %s35
    %p39 = pneg %p33
    %p40 = scmp.eq.s32.totalorder %s12, 7
    %p41 = por %p39, %p40
    %p42 = scmp.ne.s32.totalorder %s34, %s37
    %p43 = scmp.eq.s32.totalorder %s12, 0
    %p44 = por %p42, %p43
    %p45 = scmp.ne.s32.totalorder %s34, %s37
    %p46 = scmp.eq.s32.totalorder %s17, 7
    %p47 = por %p45, %p46
    %p48 = scmp.ne.s32.totalorder %s37, %s38
    %p49 = scmp.eq.s32.totalorder %s17, 0
    %p50 = por %p48, %p49
    %p51 = scmp.ne.s32.totalorder %s37, %s38
    %p52 = scmp.eq.s32.totalorder %s18, 7
    %p53 = por %p51, %p52
    %p55 = scmp.ne.s32.totalorder %s38, %s54
    %p56 = scmp.eq.s32.totalorder %s18, 0
    %p57 = por %p55, %p56
    %s59 = sadd.s32 %s58, 1
    %p62 = scmp.eq.s32.totalorder %s12, 7
    %p63 = scmp.ne.s32.totalorder %s58, %s60
    %p64 = scmp.eq.s32.totalorder %s12, 0
    %p65 = por %p63, %p64
    %p66 = scmp.ne.s32.totalorder %s58, %s60
    %p67 = scmp.eq.s32.totalorder %s17, 7
    %p68 = por %p66, %p67
    %p69 = scmp.ne.s32.totalorder %s60, %s61
    %p70 = scmp.eq.s32.totalorder %s17, 0
    %p71 = por %p69, %p70
    %p72 = scmp.ne.s32.totalorder %s60, %s61
    %p73 = scmp.eq.s32.totalorder %s18, 7
    %p74 = por %p72, %p73
    %p76 = scmp.ne.s32.totalorder %s61, %s75
    %p77 = scmp.eq.s32.totalorder %s18, 0
    %p78 = por %p76, %p77
    %s80 = sadd.s32 %s79, 1
    %p83 = scmp.eq.s32.totalorder %s12, 7
    %p84 = scmp.ne.s32.totalorder %s79, %s81
    %p85 = scmp.eq.s32.totalorder %s12, 0
    %p86 = por %p84, %p85
    %p87 = scmp.ne.s32.totalorder %s79, %s81
    %p88 = scmp.eq.s32.totalorder %s17, 7
    %p89 = por %p87, %p88
    %p90 = scmp.ne.s32.totalorder %s81, %s82
    %p91 = scmp.eq.s32.totalorder %s17, 0
    %p92 = por %p90, %p91
    %p93 = scmp.ne.s32.totalorder %s81, %s82
    %p94 = scmp.eq.s32.totalorder %s18, 7
    %p95 = por %p93, %p94
    %p97 = scmp.ne.s32.totalorder %s82, %s96
    %p98 = scmp.eq.s32.totalorder %s18, 0
    %p99 = por %p97, %p98
    %s100 = ssub.s32 %s19, %s31
    %s101 = ssub.s32 %s20, %s27
    %s102 = sor.u32 %s100, %s101
    %p103 = scmp.eq.s32.totalorder %s102, 0
    %s105 = sadd.s32 %s104, 1
    %s106 = scalar_select %p103, %s104, %s105
    %p109 = pneg %p103
    %p110 = scmp.eq.s32.totalorder %s12, 7
    %p111 = por %p109, %p110
    %p112 = scmp.ne.s32.totalorder %s104, %s107
    %p113 = scmp.eq.s32.totalorder %s12, 0
    %p114 = por %p112, %p113
    %p115 = scmp.ne.s32.totalorder %s104, %s107
    %p116 = scmp.eq.s32.totalorder %s17, 7
    %p117 = por %p115, %p116
    %p118 = scmp.ne.s32.totalorder %s107, %s108
    %p119 = scmp.eq.s32.totalorder %s17, 0
    %p120 = por %p118, %p119
    %p121 = scmp.ne.s32.totalorder %s107, %s108
    %p122 = scmp.eq.s32.totalorder %s18, 7
    %p123 = por %p121, %p122
    %p125 = scmp.ne.s32.totalorder %s108, %s124
    %p126 = scmp.eq.s32.totalorder %s18, 0
    %p127 = por %p125, %p126
    %s128 = ssub.s32 %s19, %s31
    %p129 = scmp.eq.s32.totalorder %s128, 0
    %s131 = sadd.s32 %s130, 1
    %s132 = scalar_select %p129, %s130, %s131
    %p135 = pneg %p129
    %p136 = scmp.eq.s32.totalorder %s12, 7
    %p137 = por %p135, %p136
    %p138 = scmp.ne.s32.totalorder %s130, %s133
    %p139 = scmp.eq.s32.totalorder %s12, 0
    %p140 = por %p138, %p139
    %p141 = scmp.ne.s32.totalorder %s130, %s133
    %p142 = scmp.eq.s32.totalorder %s17, 7
    %p143 = por %p141, %p142
    %p144 = scmp.ne.s32.totalorder %s133, %s134
    %p145 = scmp.eq.s32.totalorder %s17, 0
    %p146 = por %p144, %p145
    %p147 = scmp.ne.s32.totalorder %s133, %s134
    %p148 = scmp.eq.s32.totalorder %s18, 7
    %p149 = por %p147, %p148
    %p151 = scmp.ne.s32.totalorder %s134, %s150
    %p152 = scmp.eq.s32.totalorder %s18, 0
    %p153 = por %p151, %p152
    %s154 = ssub.s32 %s19, %s31
    %p155 = scmp.eq.s32.totalorder %s154, 0
    %s157 = sadd.s32 %s156, 1
    %s158 = scalar_select %p155, %s156, %s157
    %p161 = pneg %p155
    %p162 = scmp.eq.s32.totalorder %s12, 7
    %p163 = por %p161, %p162
    %p164 = scmp.ne.s32.totalorder %s156, %s159
    %p165 = scmp.eq.s32.totalorder %s12, 0
    %p166 = por %p164, %p165
    %p167 = scmp.ne.s32.totalorder %s156, %s159
    %p168 = scmp.eq.s32.totalorder %s17, 7
    %p169 = por %p167, %p168
    %p170 = scmp.ne.s32.totalorder %s159, %s160
    %p171 = scmp.eq.s32.totalorder %s17, 0
    %p172 = por %p170, %p171
    %p173 = scmp.ne.s32.totalorder %s159, %s160
    %p174 = scmp.eq.s32.totalorder %s18, 7
    %p175 = por %p173, %p174
    %p177 = scmp.ne.s32.totalorder %s160, %s176
    %p178 = scmp.eq.s32.totalorder %s18, 0
    %p179 = por %p177, %p178
    %p180 = scmp.le.s32.totalorder 1, %s12
    %p181 = scmp.lt.s32.totalorder %s12, 9
    %p182 = pnand %p180, %p181
    %p183 = pneg %p182
    // Predicated region
    $region9: #{up_block_3d.2} parent=5 // pred_check
      _
    $region10: #{up_block_3d.2} parent=5 // pred_check_branch
      %185 = sbr.rel (%p182) target = $region12
    $region11: #{up_block_3d.2} parent=5 // pred_region
      %s186 = ssub.s32 %s12, 1
      // Predicated region
      $region13: #{up_block_3d.2} parent=11 // pred_check
        %p187 = pneg %p71
      $region14: #{up_block_3d.2} parent=11 // pred_check_branch
        %189 = sbr.rel (%p187) target = $region16
      $region15: #{up_block_3d.2} parent=11 // pred_region
        _
      $region16: #{up_block_3d.2} parent=11 // pred_fallthru
        _
      // Predicated region
      $region17: #{up_block_3d.2} parent=11 // pred_check
        %p190 = pneg %p92
      $region18: #{up_block_3d.2} parent=11 // pred_check_branch
        %192 = sbr.rel (%p190) target = $region20
      $region19: #{up_block_3d.2} parent=11 // pred_region
        _
      $region20: #{up_block_3d.2} parent=11 // pred_fallthru
        _
    $region12: #{up_block_3d.2} parent=5 // pred_fallthru
      _
    %p193 = scmp.lt.s32.totalorder %s12, 8
    // Predicated region
    $region21: #{up_block_3d.2} parent=5 // pred_check
      %p194 = pneg %p193
    $region22: #{up_block_3d.2} parent=5 // pred_check_branch
      %196 = sbr.rel (%p194) target = $region24
    $region23: #{up_block_3d.2} parent=5 // pred_region
      // Predicated region
      $region25: #{up_block_3d.2} parent=23 // pred_check
        %p197 = pneg %p44
      $region26: #{up_block_3d.2} parent=23 // pred_check_branch
        %199 = sbr.rel (%p197) target = $region28
      $region27: #{up_block_3d.2} parent=23 // pred_region
        %p200 = scmp.lt.s32.totalorder %s19, 1
        %s201 = scalar_select %p200, %s19, 1
        %s202 = smul.addr %s201, 18
        %s203 = smul.addr %s202, 8
        %s204 = scalar_lea.vmem %s0, %s203
      $region28: #{up_block_3d.2} parent=23 // pred_fallthru
        _
    $region24: #{up_block_3d.2} parent=5 // pred_fallthru
      _
    %p205 = scmp.le.s32.totalorder 1, %s12
    %p206 = scmp.lt.s32.totalorder %s12, 9
    %p207 = pnand %p205, %p206
    %p208 = pneg %p207
    // Predicated region
    $region29: #{up_block_3d.2} parent=5 // pred_check
      _
    $region30: #{up_block_3d.2} parent=5 // pred_check_branch
      %210 = sbr.rel (%p207) target = $region32
    $region31: #{up_block_3d.2} parent=5 // pred_region
      %s211 = ssub.s32 %s12, 1
      %p212 = scmp.lt.s32.totalorder %s21, 1
      %s213 = scalar_select %p212, %s21, 1
      %s214 = smul.addr %s213, 18
      %s215 = smul.addr %s214, 8
      %s216 = scalar_lea.vmem %s0, %s215
      %p217 = pneg %p50
      %p218 = pneg %p47
      %p219 = pneg %p71
      %p220 = pneg %p68
      %p221 = pneg %p92
      %p222 = pneg %p89
      %p223 = pneg %p120
      %p224 = pneg %p117
      %p225 = scmp.lt.s32.totalorder %s21, 1
      %s226 = scalar_select %p225, %s21, 1
      %p227 = scmp.lt.s32.totalorder %s22, 3
      %s228 = scalar_select %p227, %s22, 3
      %s229 = smul.addr %s228, 2
      %s230 = smul.addr %s226, 8
      %s231 = sadd.s32 %s229, %s230
      %s232 = smul.addr %s231, 8
      %s233 = scalar_lea.vmem %s3, %s232
      %p234 = pneg %p146
      %p235 = pneg %p143
      %p236 = scmp.lt.s32.totalorder %s21, 1
      %s237 = scalar_select %p236, %s21, 1
      %s238 = scalar_lea.vmem %s4, %s237
      %p239 = pneg %p172
      %p240 = pneg %p169
      %p241 = scmp.lt.s32.totalorder %s21, 1
      %s242 = scalar_select %p241, %s21, 1
      %s243 = scalar_lea.vmem %s5, %s242
      %p244 = scmp.lt.s32.totalorder %s21, 1
      %s245 = scalar_select %p244, %s21, 1
      %s246 = smul.addr %s245, 18
      %s247 = smul.addr %s246, 8
      %s248 = scalar_lea.vmem %s0, %s247
      %p249 = scmp.lt.s32.totalorder %s21, 1
      %s250 = scalar_select %p249, %s21, 1
      %p251 = scmp.lt.s32.totalorder %s22, 3
      %s252 = scalar_select %p251, %s22, 3
      %s253 = smul.addr %s252, 2
      %s254 = smul.addr %s250, 8
      %s255 = sadd.s32 %s253, %s254
      %s256 = smul.addr %s255, 8
      %s257 = scalar_lea.vmem %s3, %s256
      %p258 = scmp.lt.s32.totalorder %s21, 1
      %s259 = scalar_select %p258, %s21, 1
      %s260 = scalar_lea.vmem %s4, %s259
      %p261 = scmp.lt.s32.totalorder %s21, 1
      %s262 = scalar_select %p261, %s21, 1
      %s263 = scalar_lea.vmem %s5, %s262
      %s264 = smul.u32 %s22, 24
      %s265 = scalar_lea.vmem %s248, %s264
      %v266 = vld [vmem:[%s265] sm:$0xff]
      %v267 = vld [vmem:[%s265 + $0x8] sm:$0xff]
      %v268 = vld [vmem:[%s265 + $0x10] sm:$0x3]
      %s269 = sadd.s32 %s22, 1
      %s270 = smul.u32 %s269, 24
      %s271 = scalar_lea.vmem %s248, %s270
      %v272 = vld [vmem:[%s271] sm:$0xff]
      %v273 = vld [vmem:[%s271 + $0x8] sm:$0xff]
      %v274 = vld [vmem:[%s271 + $0x10] sm:$0x3]
      %s275 = sadd.s32 %s22, 2
      %s276 = smul.u32 %s275, 24
      %s277 = scalar_lea.vmem %s248, %s276
      %v278 = vld [vmem:[%s277] sm:$0xff]
      %v279 = vld [vmem:[%s277 + $0x8] sm:$0xff]
      %v280 = vld [vmem:[%s277 + $0x10] sm:$0x3]
      %vm284 = vcmask 1046528
      %v285 = vrot.slane %v266, 1
      %v286 = vrot.slane %v267, 1
      %v287 = vsel %vm284, %v285, %v286
      %v288 = vrot.slane %v268, 1
      %v289 = vsel %vm284, %v286, %v288
      %vm292 = vcmask 1045504
      %v293 = vrot.slane %v266, 2
      %v294 = vrot.slane %v267, 2
      %v295 = vsel %vm292, %v293, %v294
      %v296 = vrot.slane %v268, 2
      %v297 = vsel %vm292, %v294, %v296
      %v303 = vrot.slane %v272, 1
      %v304 = vrot.slane %v273, 1
      %v305 = vsel %vm284, %v303, %v304
      %v306 = vrot.slane %v274, 1
      %v307 = vsel %vm284, %v304, %v306
      %v310 = vrot.slane %v272, 2
      %v311 = vrot.slane %v273, 2
      %v312 = vsel %vm292, %v310, %v311
      %v313 = vrot.slane %v274, 2
      %v314 = vsel %vm292, %v311, %v313
      %v320 = vrot.slane %v278, 1
      %v321 = vrot.slane %v279, 1
      %v322 = vsel %vm284, %v320, %v321
      %v323 = vrot.slane %v280, 1
      %v324 = vsel %vm284, %v321, %v323
      %v327 = vrot.slane %v278, 2
      %v328 = vrot.slane %v279, 2
      %v329 = vsel %vm292, %v327, %v328
      %v330 = vrot.slane %v280, 2
      %v331 = vsel %vm292, %v328, %v330
      %v334 = vld [vmem:[%s1] sm:$0xff]
      %v335 = vld [vmem:[%s1 + $0x8] sm:$0xff]
      %v336 = vld [vmem:[%s1 + $0x10] sm:$0xff]
      %v337 = vld [vmem:[%s1 + $0x18] sm:$0xff]
      %v338 = vld [vmem:[%s1 + $0x20] sm:$0xff]
      %v339 = vld [vmem:[%s1 + $0x28] sm:$0xff]
      %v340 = vld [vmem:[%s1 + $0x30] sm:$0xff]
      %v341 = vld [vmem:[%s1 + $0x38] sm:$0xff]
      %v342 = vld [vmem:[%s1 + $0x40] sm:$0xff]
      %v343 = vld [vmem:[%s1 + $0x48] sm:$0xff]
      %v344 = vld [vmem:[%s1 + $0x50] sm:$0xff]
      %v345 = vld [vmem:[%s1 + $0x58] sm:$0xff]
      %v346 = vld [vmem:[%s1 + $0x60] sm:$0xff]
      %v347 = vld [vmem:[%s1 + $0x68] sm:$0xff]
      %v348 = vld [vmem:[%s1 + $0x70] sm:$0xff]
      %v349 = vld [vmem:[%s1 + $0x78] sm:$0xff]
      %v350 = vld [vmem:[%s1 + $0x80] sm:$0xff]
      %v351 = vld [vmem:[%s1 + $0x88] sm:$0xff]
      %v352 = vld [vmem:[%s1 + $0x90] sm:$0xff]
      %v353 = vld [vmem:[%s1 + $0x98] sm:$0xff]
      %v354 = vld [vmem:[%s1 + $0xa0] sm:$0xff]
      %v355 = vld [vmem:[%s1 + $0xa8] sm:$0xff]
      %v356 = vld [vmem:[%s1 + $0xb0] sm:$0xff]
      %v357 = vld [vmem:[%s1 + $0xb8] sm:$0xff]
      %v358 = vld [vmem:[%s1 + $0xc0] sm:$0xff]
      %v359 = vld [vmem:[%s1 + $0xc8] sm:$0xff]
      %v360 = vld [vmem:[%s1 + $0xd0] sm:$0xff]
      %v361 = vld [vmem:[%s1 + $0xd8] sm:$0xff]
      %v362 = vld [vmem:[%s1 + $0xe0] sm:$0xff]
      %v363 = vld [vmem:[%s1 + $0xe8] sm:$0xff]
      %v364 = vld [vmem:[%s1 + $0xf0] sm:$0xff]
      %v365 = vld [vmem:[%s1 + $0xf8] sm:$0xff]
      %v366 = vld [vmem:[%s1 + $0x100] sm:$0xff]
      %v367 = vld [vmem:[%s1 + $0x108] sm:$0xff]
      %v368 = vld [vmem:[%s1 + $0x110] sm:$0xff]
      %v369 = vld [vmem:[%s1 + $0x118] sm:$0xff]
      %v370 = vld [vmem:[%s1 + $0x120] sm:$0xff]
      %v371 = vld [vmem:[%s1 + $0x128] sm:$0xff]
      %v372 = vld [vmem:[%s1 + $0x130] sm:$0xff]
      %v373 = vld [vmem:[%s1 + $0x138] sm:$0xff]
      %v374 = vld [vmem:[%s1 + $0x140] sm:$0xff]
      %v375 = vld [vmem:[%s1 + $0x148] sm:$0xff]
      %v376 = vld [vmem:[%s1 + $0x150] sm:$0xff]
      %v377 = vld [vmem:[%s1 + $0x158] sm:$0xff]
      %v378 = vld [vmem:[%s1 + $0x160] sm:$0xff]
      %v379 = vld [vmem:[%s1 + $0x168] sm:$0xff]
      %v380 = vld [vmem:[%s1 + $0x170] sm:$0xff]
      %v381 = vld [vmem:[%s1 + $0x178] sm:$0xff]
      %v382 = vld [vmem:[%s1 + $0x180] sm:$0xff]
      %v383 = vld [vmem:[%s1 + $0x188] sm:$0xff]
      %v384 = vld [vmem:[%s1 + $0x190] sm:$0xff]
      %v385 = vld [vmem:[%s1 + $0x198] sm:$0xff]
      %v386 = vld [vmem:[%s1 + $0x1a0] sm:$0xff]
      %v387 = vld [vmem:[%s1 + $0x1a8] sm:$0xff]
      %v388 = vld [vmem:[%s1 + $0x1b0] sm:$0xff]
      %v389 = vld [vmem:[%s1 + $0x1b8] sm:$0xff]
      %v390 = vld [vmem:[%s1 + $0x1c0] sm:$0xff]
      %v391 = vld [vmem:[%s1 + $0x1c8] sm:$0xff]
      %v392 = vld [vmem:[%s1 + $0x1d0] sm:$0xff]
      %v393 = vld [vmem:[%s1 + $0x1d8] sm:$0xff]
      %v394 = vld [vmem:[%s1 + $0x1e0] sm:$0xff]
      %v395 = vld [vmem:[%s1 + $0x1e8] sm:$0xff]
      %v396 = vld [vmem:[%s1 + $0x1f0] sm:$0xff]
      %v397 = vld [vmem:[%s1 + $0x1f8] sm:$0xff]
      %v398 = vld [vmem:[%s1 + $0x200] sm:$0xff]
      %v399 = vld [vmem:[%s1 + $0x208] sm:$0xff]
      %v400 = vld [vmem:[%s1 + $0x210] sm:$0xff]
      %v401 = vld [vmem:[%s1 + $0x218] sm:$0xff]
      %v402 = vld [vmem:[%s1 + $0x220] sm:$0xff]
      %v403 = vld [vmem:[%s1 + $0x228] sm:$0xff]
      %v404 = vld [vmem:[%s1 + $0x230] sm:$0xff]
      %v405 = vld [vmem:[%s1 + $0x238] sm:$0xff]
      %v406 = vld [vmem:[%s1 + $0x240] sm:$0xff]
      %v407 = vld [vmem:[%s1 + $0x248] sm:$0xff]
      %v408 = vld [vmem:[%s1 + $0x250] sm:$0xff]
      %v409 = vld [vmem:[%s1 + $0x258] sm:$0xff]
      %v410 = vld [vmem:[%s1 + $0x260] sm:$0xff]
      %v411 = vld [vmem:[%s1 + $0x268] sm:$0xff]
      %v412 = vld [vmem:[%s1 + $0x270] sm:$0xff]
      %v413 = vld [vmem:[%s1 + $0x278] sm:$0xff]
      %v414 = vld [vmem:[%s1 + $0x280] sm:$0xff]
      %v415 = vld [vmem:[%s1 + $0x288] sm:$0xff]
      %v416 = vld [vmem:[%s1 + $0x290] sm:$0xff]
      %v417 = vld [vmem:[%s1 + $0x298] sm:$0xff]
      %v418 = vld [vmem:[%s1 + $0x2a0] sm:$0xff]
      %v419 = vld [vmem:[%s1 + $0x2a8] sm:$0xff]
      %v420 = vld [vmem:[%s1 + $0x2b0] sm:$0xff]
      %v421 = vld [vmem:[%s1 + $0x2b8] sm:$0xff]
      %v422 = vld [vmem:[%s1 + $0x2c0] sm:$0xff]
      %v423 = vld [vmem:[%s1 + $0x2c8] sm:$0xff]
      %v424 = vld [vmem:[%s1 + $0x2d0] sm:$0xff]
      %v425 = vld [vmem:[%s1 + $0x2d8] sm:$0xff]
      %v426 = vld [vmem:[%s1 + $0x2e0] sm:$0xff]
      %v427 = vld [vmem:[%s1 + $0x2e8] sm:$0xff]
      %v428 = vld [vmem:[%s1 + $0x2f0] sm:$0xff]
      %v429 = vld [vmem:[%s1 + $0x2f8] sm:$0xff]
      %v430 = vld [vmem:[%s1 + $0x300] sm:$0xff]
      %v431 = vld [vmem:[%s1 + $0x308] sm:$0xff]
      %v432 = vld [vmem:[%s1 + $0x310] sm:$0xff]
      %v433 = vld [vmem:[%s1 + $0x318] sm:$0xff]
      %v434 = vld [vmem:[%s1 + $0x320] sm:$0xff]
      %v435 = vld [vmem:[%s1 + $0x328] sm:$0xff]
      %v436 = vld [vmem:[%s1 + $0x330] sm:$0xff]
      %v437 = vld [vmem:[%s1 + $0x338] sm:$0xff]
      %v438 = vld [vmem:[%s1 + $0x340] sm:$0xff]
      %v439 = vld [vmem:[%s1 + $0x348] sm:$0xff]
      %v440 = vld [vmem:[%s1 + $0x350] sm:$0xff]
      %v441 = vld [vmem:[%s1 + $0x358] sm:$0xff]
      %v442 = vld [vmem:[%s1 + $0x360] sm:$0xff]
      %v443 = vld [vmem:[%s1 + $0x368] sm:$0xff]
      %v444 = vld [vmem:[%s1 + $0x370] sm:$0xff]
      %v445 = vld [vmem:[%s1 + $0x378] sm:$0xff]
      %v446 = vld [vmem:[%s1 + $0x380] sm:$0xff]
      %v447 = vld [vmem:[%s1 + $0x388] sm:$0xff]
      %v448 = vld [vmem:[%s1 + $0x390] sm:$0xff]
      %v449 = vld [vmem:[%s1 + $0x398] sm:$0xff]
      %v450 = vld [vmem:[%s1 + $0x3a0] sm:$0xff]
      %v451 = vld [vmem:[%s1 + $0x3a8] sm:$0xff]
      %v452 = vld [vmem:[%s1 + $0x3b0] sm:$0xff]
      %v453 = vld [vmem:[%s1 + $0x3b8] sm:$0xff]
      %v454 = vld [vmem:[%s1 + $0x3c0] sm:$0xff]
      %v455 = vld [vmem:[%s1 + $0x3c8] sm:$0xff]
      %v456 = vld [vmem:[%s1 + $0x3d0] sm:$0xff]
      %v457 = vld [vmem:[%s1 + $0x3d8] sm:$0xff]
      %v458 = vld [vmem:[%s1 + $0x3e0] sm:$0xff]
      %v459 = vld [vmem:[%s1 + $0x3e8] sm:$0xff]
      %v460 = vld [vmem:[%s1 + $0x3f0] sm:$0xff]
      %v461 = vld [vmem:[%s1 + $0x3f8] sm:$0xff]
      %v462 = vld [vmem:[%s1 + $0x400] sm:$0xff]
      %v463 = vld [vmem:[%s1 + $0x408] sm:$0xff]
      %v464 = vld [vmem:[%s1 + $0x410] sm:$0xff]
      %v465 = vld [vmem:[%s1 + $0x418] sm:$0xff]
      %v466 = vld [vmem:[%s1 + $0x420] sm:$0xff]
      %v467 = vld [vmem:[%s1 + $0x428] sm:$0xff]
      %v468 = vld [vmem:[%s1 + $0x430] sm:$0xff]
      %v469 = vld [vmem:[%s1 + $0x438] sm:$0xff]
      %v470 = vld [vmem:[%s1 + $0x440] sm:$0xff]
      %v471 = vld [vmem:[%s1 + $0x448] sm:$0xff]
      %v472 = vld [vmem:[%s1 + $0x450] sm:$0xff]
      %v473 = vld [vmem:[%s1 + $0x458] sm:$0xff]
      %v474 = vld [vmem:[%s1 + $0x460] sm:$0xff]
      %v475 = vld [vmem:[%s1 + $0x468] sm:$0xff]
      %v476 = vld [vmem:[%s1 + $0x470] sm:$0xff]
      %v477 = vld [vmem:[%s1 + $0x478] sm:$0xff]
      %v478 = vld [vmem:[%s2] sm:$0x1]
      %v480 = vlaneseq
      %v481 = vshrl.u32 %v480, 7
      %v482 = vsub.s32 0, %v481
      %v483 = vrot.slane %v478, %v482
      %485 = vmatprep.subr.mxu0 0.0
      %486 = vmatpush1.msra.mxu0 %v334
      %487 = vmatprep.subr.mxu0 0.0
      %488 = vmatpush1.msra.mxu0 %v335
      %489 = vmatprep.subr.mxu0 0.0
      %490 = vmatpush1.msra.mxu0 %v336
      %491 = vmatprep.subr.mxu0 0.0
      %492 = vmatpush1.msra.mxu0 %v337
      %493 = vmatprep.subr.mxu0 0.0
      %494 = vmatpush1.msra.mxu0 %v338
      %495 = vmatprep.subr.mxu0 0.0
      %496 = vmatpush1.msra.mxu0 %v339
      %497 = vmatprep.subr.mxu0 0.0
      %498 = vmatpush1.msra.mxu0 %v340
      %499 = vmatprep.subr.mxu0 0.0
      %500 = vmatpush1.msra.mxu0 %v341
      %501 = vmatprep.subr.mxu0 0.0
      %502 = vmatpush1.msra.mxu0 %v342
      %503 = vmatprep.subr.mxu0 0.0
      %504 = vmatpush1.msra.mxu0 %v343
      %505 = vmatprep.subr.mxu0 0.0
      %506 = vmatpush1.msra.mxu0 %v344
      %507 = vmatprep.subr.mxu0 0.0
      %508 = vmatpush1.msra.mxu0 %v345
      %509 = vmatprep.subr.mxu0 0.0
      %510 = vmatpush1.msra.mxu0 %v346
      %511 = vmatprep.subr.mxu0 0.0
      %512 = vmatpush1.msra.mxu0 %v347
      %513 = vmatprep.subr.mxu0 0.0
      %514 = vmatpush1.msra.mxu0 %v348
      %515 = vmatprep.subr.mxu0 0.0
      %516 = vmatpush1.msra.mxu0 %v349
      %517 = vmatprep.subr.mxu0 0.0
      %518 = vmatpush1.msra.mxu0 %v350
      %519 = vmatprep.subr.mxu0 0.0
      %520 = vmatpush1.msra.mxu0 %v351
      %521 = vmatprep.subr.mxu0 0.0
      %522 = vmatpush1.msra.mxu0 %v352
      %523 = vmatprep.subr.mxu0 0.0
      %524 = vmatpush1.msra.mxu0 %v353
      %525 = vmatprep.subr.mxu0 0.0
      %526 = vmatpush1.msra.mxu0 %v354
      %527 = vmatprep.subr.mxu0 0.0
      %528 = vmatpush1.msra.mxu0 %v355
      %529 = vmatprep.subr.mxu0 0.0
      %530 = vmatpush1.msra.mxu0 %v356
      %531 = vmatprep.subr.mxu0 0.0
      %532 = vmatpush1.msra.mxu0 %v357
      %533 = vmatprep.subr.mxu0 0.0
      %534 = vmatpush1.msra.mxu0 %v358
      %535 = vmatprep.subr.mxu0 0.0
      %536 = vmatpush1.msra.mxu0 %v359
      %537 = vmatprep.subr.mxu0 0.0
      %538 = vmatpush1.msra.mxu0 %v360
      %539 = vmatprep.subr.mxu0 0.0
      %540 = vmatpush1.msra.mxu0 %v361
      %541 = vmatprep.subr.mxu0 0.0
      %542 = vmatpush1.msra.mxu0 %v362
      %543 = vmatprep.subr.mxu0 0.0
      %544 = vmatpush1.msra.mxu0 %v363
      %545 = vmatprep.subr.mxu0 0.0
      %546 = vmatpush1.msra.mxu0 %v364
      %547 = vmatprep.subr.mxu0 0.0
      %548 = vmatpush1.msra.mxu0 %v365
      %549 = vmatprep.mubr.f32.mxu0 %v287
      %550 = vmatmul.mubr.f32.gmra.mrb[0].mxu0 %v266
      %v551 = vpop.f32.mrb[0].mxu0
      %v552 = vadd.f32 %v483, %v551
      %v553 = vpop.f32.mrb[0].mxu0
      %554 = vmatprep.mubr.f32.mxu0 %v289
      %555 = vmatmul.mubr.f32.gmra.mrb[0].mxu0 %v267
      %v556 = vpop.f32.mrb[0].mxu0
      %v557 = vadd.f32 %v483, %v556
      %v558 = vpop.f32.mrb[0].mxu0
      %559 = vdwg.mxu0
      %560 = vmatprep.subr.mxu0 0.0
      %561 = vmatpush1.msra.mxu0 %v366
      %562 = vmatprep.subr.mxu0 0.0
      %563 = vmatpush1.msra.mxu0 %v367
      %564 = vmatprep.subr.mxu0 0.0
      %565 = vmatpush1.msra.mxu0 %v368
      %566 = vmatprep.subr.mxu0 0.0
      %567 = vmatpush1.msra.mxu0 %v369
      %568 = vmatprep.subr.mxu0 0.0
      %569 = vmatpush1.msra.mxu0 %v370
      %570 = vmatprep.subr.mxu0 0.0
      %571 = vmatpush1.msra.mxu0 %v371
      %572 = vmatprep.subr.mxu0 0.0
      %573 = vmatpush1.msra.mxu0 %v372
      %574 = vmatprep.subr.mxu0 0.0
      %575 = vmatpush1.msra.mxu0 %v373
      %576 = vmatprep.subr.mxu0 0.0
      %577 = vmatpush1.msra.mxu0 %v374
      %578 = vmatprep.subr.mxu0 0.0
      %579 = vmatpush1.msra.mxu0 %v375
      %580 = vmatprep.subr.mxu0 0.0
      %581 = vmatpush1.msra.mxu0 %v376
      %582 = vmatprep.subr.mxu0 0.0
      %583 = vmatpush1.msra.mxu0 %v377
      %584 = vmatprep.subr.mxu0 0.0
      %585 = vmatpush1.msra.mxu0 %v378
      %586 = vmatprep.subr.mxu0 0.0
      %587 = vmatpush1.msra.mxu0 %v379
      %588 = vmatprep.subr.mxu0 0.0
      %589 = vmatpush1.msra.mxu0 %v380
      %590 = vmatprep.subr.mxu0 0.0
      %591 = vmatpush1.msra.mxu0 %v381
      %592 = vmatprep.subr.mxu0 0.0
      %593 = vmatpush1.msra.mxu0 %v382
      %594 = vmatprep.subr.mxu0 0.0
      %595 = vmatpush1.msra.mxu0 %v383
      %596 = vmatprep.subr.mxu0 0.0
      %597 = vmatpush1.msra.mxu0 %v384
      %598 = vmatprep.subr.mxu0 0.0
      %599 = vmatpush1.msra.mxu0 %v385
      %600 = vmatprep.subr.mxu0 0.0
      %601 = vmatpush1.msra.mxu0 %v386
      %602 = vmatprep.subr.mxu0 0.0
      %603 = vmatpush1.msra.mxu0 %v387
      %604 = vmatprep.subr.mxu0 0.0
      %605 = vmatpush1.msra.mxu0 %v388
      %606 = vmatprep.subr.mxu0 0.0
      %607 = vmatpush1.msra.mxu0 %v389
      %608 = vmatprep.subr.mxu0 0.0
      %609 = vmatpush1.msra.mxu0 %v390
      %610 = vmatprep.subr.mxu0 0.0
      %611 = vmatpush1.msra.mxu0 %v391
      %612 = vmatprep.subr.mxu0 0.0
      %613 = vmatpush1.msra.mxu0 %v392
      %614 = vmatprep.subr.mxu0 0.0
      %615 = vmatpush1.msra.mxu0 %v393
      %616 = vmatprep.subr.mxu0 0.0
      %617 = vmatpush1.msra.mxu0 %v394
      %618 = vmatprep.subr.mxu0 0.0
      %619 = vmatpush1.msra.mxu0 %v395
      %620 = vmatprep.subr.mxu0 0.0
      %621 = vmatpush1.msra.mxu0 %v396
      %622 = vmatprep.subr.mxu0 0.0
      %623 = vmatpush1.msra.mxu0 %v397
      %624 = vmatprep.mubr.f32.mxu0 %v272
      %625 = vmatmul.mubr.f32.gmra.mrb[0].mxu0 %v295
      %v626 = vpop.f32.mrb[0].mxu0
      %v627 = vadd.f32 %v552, %v626
      %v628 = vpop.f32.mrb[0].mxu0
      %629 = vmatprep.mubr.f32.mxu0 %v273
      %630 = vmatmul.mubr.f32.gmra.mrb[0].mxu0 %v297
      %v631 = vpop.f32.mrb[0].mxu0
      %v632 = vadd.f32 %v557, %v631
      %v633 = vpop.f32.mrb[0].mxu0
      %634 = vdwg.mxu0
      %635 = vmatprep.subr.mxu0 0.0
      %636 = vmatpush1.msra.mxu0 %v398
      %637 = vmatprep.subr.mxu0 0.0
      %638 = vmatpush1.msra.mxu0 %v399
      %639 = vmatprep.subr.mxu0 0.0
      %640 = vmatpush1.msra.mxu0 %v400
      %641 = vmatprep.subr.mxu0 0.0
      %642 = vmatpush1.msra.mxu0 %v401
      %643 = vmatprep.subr.mxu0 0.0
      %644 = vmatpush1.msra.mxu0 %v402
      %645 = vmatprep.subr.mxu0 0.0
      %646 = vmatpush1.msra.mxu0 %v403
      %647 = vmatprep.subr.mxu0 0.0
      %648 = vmatpush1.msra.mxu0 %v404
      %649 = vmatprep.subr.mxu0 0.0
      %650 = vmatpush1.msra.mxu0 %v405
      %651 = vmatprep.subr.mxu0 0.0
      %652 = vmatpush1.msra.mxu0 %v406
      %653 = vmatprep.subr.mxu0 0.0
      %654 = vmatpush1.msra.mxu0 %v407
      %655 = vmatprep.subr.mxu0 0.0
      %656 = vmatpush1.msra.mxu0 %v408
      %657 = vmatprep.subr.mxu0 0.0
      %658 = vmatpush1.msra.mxu0 %v409
      %659 = vmatprep.subr.mxu0 0.0
      %660 = vmatpush1.msra.mxu0 %v410
      %661 = vmatprep.subr.mxu0 0.0
      %662 = vmatpush1.msra.mxu0 %v411
      %663 = vmatprep.subr.mxu0 0.0
      %664 = vmatpush1.msra.mxu0 %v412
      %665 = vmatprep.subr.mxu0 0.0
      %666 = vmatpush1.msra.mxu0 %v413
      %667 = vmatprep.subr.mxu0 0.0
      %668 = vmatpush1.msra.mxu0 %v414
      %669 = vmatprep.subr.mxu0 0.0
      %670 = vmatpush1.msra.mxu0 %v415
      %671 = vmatprep.subr.mxu0 0.0
      %672 = vmatpush1.msra.mxu0 %v416
      %673 = vmatprep.subr.mxu0 0.0
      %674 = vmatpush1.msra.mxu0 %v417
      %675 = vmatprep.subr.mxu0 0.0
      %676 = vmatpush1.msra.mxu0 %v418
      %677 = vmatprep.subr.mxu0 0.0
      %678 = vmatpush1.msra.mxu0 %v419
      %679 = vmatprep.subr.mxu0 0.0
      %680 = vmatpush1.msra.mxu0 %v420
      %681 = vmatprep.subr.mxu0 0.0
      %682 = vmatpush1.msra.mxu0 %v421
      %683 = vmatprep.subr.mxu0 0.0
      %684 = vmatpush1.msra.mxu0 %v422
      %685 = vmatprep.subr.mxu0 0.0
      %686 = vmatpush1.msra.mxu0 %v423
      %687 = vmatprep.subr.mxu0 0.0
      %688 = vmatpush1.msra.mxu0 %v424
      %689 = vmatprep.subr.mxu0 0.0
      %690 = vmatpush1.msra.mxu0 %v425
      %691 = vmatprep.subr.mxu0 0.0
      %692 = vmatpush1.msra.mxu0 %v426
      %693 = vmatprep.subr.mxu0 0.0
      %694 = vmatpush1.msra.mxu0 %v427
      %695 = vmatprep.subr.mxu0 0.0
      %696 = vmatpush1.msra.mxu0 %v428
      %697 = vmatprep.subr.mxu0 0.0
      %698 = vmatpush1.msra.mxu0 %v429
      %699 = vmatprep.mubr.f32.mxu0 %v312
      %700 = vmatmul.mubr.f32.gmra.mrb[0].mxu0 %v305
      %v701 = vpop.f32.mrb[0].mxu0
      %v702 = vadd.f32 %v627, %v701
      %v703 = vpop.f32.mrb[0].mxu0
      %704 = vmatprep.mubr.f32.mxu0 %v314
      %705 = vmatmul.mubr.f32.gmra.mrb[0].mxu0 %v307
      %v706 = vpop.f32.mrb[0].mxu0
      %v707 = vadd.f32 %v632, %v706
      %v708 = vpop.f32.mrb[0].mxu0
      %709 = vdwg.mxu0
      %710 = vmatprep.subr.mxu0 0.0
      %711 = vmatpush1.msra.mxu0 %v430
      %712 = vmatprep.subr.mxu0 0.0
      %713 = vmatpush1.msra.mxu0 %v431
      %714 = vmatprep.subr.mxu0 0.0
      %715 = vmatpush1.msra.mxu0 %v432
      %716 = vmatprep.subr.mxu0 0.0
      %717 = vmatpush1.msra.mxu0 %v433
      %718 = vmatprep.subr.mxu0 0.0
      %719 = vmatpush1.msra.mxu0 %v434
      %720 = vmatprep.subr.mxu0 0.0
      %721 = vmatpush1.msra.mxu0 %v435
      %722 = vmatprep.subr.mxu0 0.0
      %723 = vmatpush1.msra.mxu0 %v436
      %724 = vmatprep.subr.mxu0 0.0
      %725 = vmatpush1.msra.mxu0 %v437
      %726 = vmatprep.subr.mxu0 0.0
      %727 = vmatpush1.msra.mxu0 %v438
      %728 = vmatprep.subr.mxu0 0.0
      %729 = vmatpush1.msra.mxu0 %v439
      %730 = vmatprep.subr.mxu0 0.0
      %731 = vmatpush1.msra.mxu0 %v440
      %732 = vmatprep.subr.mxu0 0.0
      %733 = vmatpush1.msra.mxu0 %v441
      %734 = vmatprep.subr.mxu0 0.0
      %735 = vmatpush1.msra.mxu0 %v442
      %736 = vmatprep.subr.mxu0 0.0
      %737 = vmatpush1.msra.mxu0 %v443
      %738 = vmatprep.subr.mxu0 0.0
      %739 = vmatpush1.msra.mxu0 %v444
      %740 = vmatprep.subr.mxu0 0.0
      %741 = vmatpush1.msra.mxu0 %v445
      %742 = vmatprep.subr.mxu0 0.0
      %743 = vmatpush1.msra.mxu0 %v446
      %744 = vmatprep.subr.mxu0 0.0
      %745 = vmatpush1.msra.mxu0 %v447
      %746 = vmatprep.subr.mxu0 0.0
      %747 = vmatpush1.msra.mxu0 %v448
      %748 = vmatprep.subr.mxu0 0.0
      %749 = vmatpush1.msra.mxu0 %v449
      %750 = vmatprep.subr.mxu0 0.0
      %751 = vmatpush1.msra.mxu0 %v450
      %752 = vmatprep.subr.mxu0 0.0
      %753 = vmatpush1.msra.mxu0 %v451
      %754 = vmatprep.subr.mxu0 0.0
      %755 = vmatpush1.msra.mxu0 %v452
      %756 = vmatprep.subr.mxu0 0.0
      %757 = vmatpush1.msra.mxu0 %v453
      %758 = vmatprep.subr.mxu0 0.0
      %759 = vmatpush1.msra.mxu0 %v454
      %760 = vmatprep.subr.mxu0 0.0
      %761 = vmatpush1.msra.mxu0 %v455
      %762 = vmatprep.subr.mxu0 0.0
      %763 = vmatpush1.msra.mxu0 %v456
      %764 = vmatprep.subr.mxu0 0.0
      %765 = vmatpush1.msra.mxu0 %v457
      %766 = vmatprep.subr.mxu0 0.0
      %767 = vmatpush1.msra.mxu0 %v458
      %768 = vmatprep.subr.mxu0 0.0
      %769 = vmatpush1.msra.mxu0 %v459
      %770 = vmatprep.subr.mxu0 0.0
      %771 = vmatpush1.msra.mxu0 %v460
      %772 = vmatprep.subr.mxu0 0.0
      %773 = vmatpush1.msra.mxu0 %v461
      %774 = vmatprep.mubr.f32.mxu0 %v322
      %775 = vmatmul.mubr.f32.gmra.mrb[0].mxu0 %v278
      %v776 = vpop.f32.mrb[0].mxu0
      %v777 = vadd.f32 %v702, %v776
      %v778 = vpop.f32.mrb[0].mxu0
      %779 = vmatprep.mubr.f32.mxu0 %v324
      %780 = vmatmul.mubr.f32.gmra.mrb[0].mxu0 %v279
      %v781 = vpop.f32.mrb[0].mxu0
      %v782 = vadd.f32 %v707, %v781
      %v783 = vpop.f32.mrb[0].mxu0
      %784 = vdwg.mxu0
      %785 = vmatprep.subr.mxu0 0.0
      %786 = vmatpush1.msra.mxu0 %v462
      %787 = vmatprep.subr.mxu0 0.0
      %788 = vmatpush1.msra.mxu0 %v463
      %789 = vmatprep.subr.mxu0 0.0
      %790 = vmatpush1.msra.mxu0 %v464
      %791 = vmatprep.subr.mxu0 0.0
      %792 = vmatpush1.msra.mxu0 %v465
      %793 = vmatprep.subr.mxu0 0.0
      %794 = vmatpush1.msra.mxu0 %v466
      %795 = vmatprep.subr.mxu0 0.0
      %796 = vmatpush1.msra.mxu0 %v467
      %797 = vmatprep.subr.mxu0 0.0
      %798 = vmatpush1.msra.mxu0 %v468
      %799 = vmatprep.subr.mxu0 0.0
      %800 = vmatpush1.msra.mxu0 %v469
      %801 = vmatprep.subr.mxu0 0.0
      %802 = vmatpush1.msra.mxu0 %v470
      %803 = vmatprep.subr.mxu0 0.0
      %804 = vmatpush1.msra.mxu0 %v471
      %805 = vmatprep.subr.mxu0 0.0
      %806 = vmatpush1.msra.mxu0 %v472
      %807 = vmatprep.subr.mxu0 0.0
      %808 = vmatpush1.msra.mxu0 %v473
      %809 = vmatprep.subr.mxu0 0.0
      %810 = vmatpush1.msra.mxu0 %v474
      %811 = vmatprep.subr.mxu0 0.0
      %812 = vmatpush1.msra.mxu0 %v475
      %813 = vmatprep.subr.mxu0 0.0
      %814 = vmatpush1.msra.mxu0 %v476
      %815 = vmatprep.subr.mxu0 0.0
      %816 = vmatpush1.msra.mxu0 %v477
      %817 = vmatprep.subr.mxu0 0.0
      %818 = vmatpush1.msra.mxu0 0.0
      %819 = vmatprep.subr.mxu0 0.0
      %820 = vmatpush1.msra.mxu0 0.0
      %821 = vmatprep.subr.mxu0 0.0
      %822 = vmatpush1.msra.mxu0 0.0
      %823 = vmatprep.subr.mxu0 0.0
      %824 = vmatpush1.msra.mxu0 0.0
      %825 = vmatprep.subr.mxu0 0.0
      %826 = vmatpush1.msra.mxu0 0.0
      %827 = vmatprep.subr.mxu0 0.0
      %828 = vmatpush1.msra.mxu0 0.0
      %829 = vmatprep.subr.mxu0 0.0
      %830 = vmatpush1.msra.mxu0 0.0
      %831 = vmatprep.subr.mxu0 0.0
      %832 = vmatpush1.msra.mxu0 0.0
      %833 = vmatprep.subr.mxu0 0.0
      %834 = vmatpush1.msra.mxu0 0.0
      %835 = vmatprep.subr.mxu0 0.0
      %836 = vmatpush1.msra.mxu0 0.0
      %837 = vmatprep.subr.mxu0 0.0
      %838 = vmatpush1.msra.mxu0 0.0
      %839 = vmatprep.subr.mxu0 0.0
      %840 = vmatpush1.msra.mxu0 0.0
      %841 = vmatprep.subr.mxu0 0.0
      %842 = vmatpush1.msra.mxu0 0.0
      %843 = vmatprep.subr.mxu0 0.0
      %844 = vmatpush1.msra.mxu0 0.0
      %845 = vmatprep.subr.mxu0 0.0
      %846 = vmatpush1.msra.mxu0 0.0
      %847 = vmatprep.subr.mxu0 0.0
      %848 = vmatpush1.msra.mxu0 0.0
      %849 = vmatprep.mubr.f32.mxu0 0.0
      %850 = vmatmul.mubr.f32.gmra.mrb[0].mxu0 %v329
      %v851 = vpop.f32.mrb[0].mxu0
      %v852 = vadd.f32 %v777, %v851
      %v853 = vpop.f32.mrb[0].mxu0
      %854 = vmatprep.mubr.f32.mxu0 0.0
      %855 = vmatmul.mubr.f32.gmra.mrb[0].mxu0 %v331
      %v856 = vpop.f32.mrb[0].mxu0
      %v857 = vadd.f32 %v782, %v856
      %v858 = vpop.f32.mrb[0].mxu0
      %859 = vdwg.mxu0
      %860 = vst [vmem:[%s257] sm:$0xff] %v852
      %861 = vst [vmem:[%s257 + $0x8] sm:$0xff] %v857
      %p862 = scmp.eq.s32.totalorder %s22, 0
      // Predicated region
      $region33: #{up_block_3d.2} parent=31 // pred_check
        %p863 = pneg %p862
      $region34: #{up_block_3d.2} parent=31 // pred_check_branch
        %865 = sbr.rel (%p863) target = $region36
      $region35: #{up_block_3d.2} parent=31 // pred_region
        %866 = vst [vmem:[%s260] sm:$0x1] 0.0
        %867 = vst [vmem:[%s263] sm:$0x1] 0.0
      $region36: #{up_block_3d.2} parent=31 // pred_fallthru
        _
      %v868 = vld [vmem:[%s260] sm:$0x1]
      %v869 = vadd.f32 %v852, %v857
      %v870 = vrot.slane %v869, 4
      %v871 = vadd.f32 %v869, %v870
      %v872 = vrot.slane %v871, 2
      %v873 = vadd.f32 %v871, %v872
      %v874 = vrot.slane %v873, 1
      %v875 = vadd.f32 %v873, %v874
      %v876 = vadd.f32 %v868, %v875
      %877 = vst [vmem:[%s260] sm:$0x1] %v876
      %v878 = vld [vmem:[%s263] sm:$0x1]
      %v879 = vmul.f32 %v852, %v852
      %v880 = vmul.f32 %v857, %v857
      %v881 = vadd.f32 %v879, %v880
      %v882 = vrot.slane %v881, 4
      %v883 = vadd.f32 %v881, %v882
      %v884 = vrot.slane %v883, 2
      %v885 = vadd.f32 %v883, %v884
      %v886 = vrot.slane %v885, 1
      %v887 = vadd.f32 %v885, %v886
      %v888 = vadd.f32 %v878, %v887
      %889 = vst [vmem:[%s263] sm:$0x1] %v888
      %p890 = scmp.lt.s32.totalorder %s21, 1
      %s891 = scalar_select %p890, %s21, 1
      %p892 = scmp.lt.s32.totalorder %s22, 3
      %s893 = scalar_select %p892, %s22, 3
      %s894 = smul.addr %s893, 2
      %s895 = smul.addr %s891, 8
      %s896 = sadd.s32 %s894, %s895
      %s897 = smul.addr %s896, 8
      %s898 = scalar_lea.vmem %s3, %s897
      %p899 = scmp.lt.s32.totalorder %s21, 1
      %s900 = scalar_select %p899, %s21, 1
      %s901 = scalar_lea.vmem %s4, %s900
      %p902 = scmp.lt.s32.totalorder %s21, 1
      %s903 = scalar_select %p902, %s21, 1
      %s904 = scalar_lea.vmem %s5, %s903
      // Predicated region
      $region37: #{up_block_3d.2} parent=31 // pred_check
        %p905 = pneg %p117
      $region38: #{up_block_3d.2} parent=31 // pred_check_branch
        %907 = sbr.rel (%p905) target = $region40
      $region39: #{up_block_3d.2} parent=31 // pred_region
        _
      $region40: #{up_block_3d.2} parent=31 // pred_fallthru
        _
      // Predicated region
      $region41: #{up_block_3d.2} parent=31 // pred_check
        %p908 = pneg %p143
      $region42: #{up_block_3d.2} parent=31 // pred_check_branch
        %910 = sbr.rel (%p908) target = $region44
      $region43: #{up_block_3d.2} parent=31 // pred_region
        _
      $region44: #{up_block_3d.2} parent=31 // pred_fallthru
        _
      // Predicated region
      $region45: #{up_block_3d.2} parent=31 // pred_check
        %p911 = pneg %p169
      $region46: #{up_block_3d.2} parent=31 // pred_check_branch
        %913 = sbr.rel (%p911) target = $region48
      $region47: #{up_block_3d.2} parent=31 // pred_region
        _
      $region48: #{up_block_3d.2} parent=31 // pred_fallthru
        _
    $region32: #{up_block_3d.2} parent=5 // pred_fallthru
      _
    %p914 = scmp.le.s32.totalorder 2, %s12
    // Predicated region
    $region49: #{up_block_3d.2} parent=5 // pred_check
      %p915 = pneg %p914
    $region50: #{up_block_3d.2} parent=5 // pred_check_branch
      %917 = sbr.rel (%p915) target = $region52
    $region51: #{up_block_3d.2} parent=5 // pred_region
      %s918 = ssub.s32 %s12, 2
      // Predicated region
      $region53: #{up_block_3d.2} parent=51 // pred_check
        %p919 = pneg %p123
      $region54: #{up_block_3d.2} parent=51 // pred_check_branch
        %921 = sbr.rel (%p919) target = $region56
      $region55: #{up_block_3d.2} parent=51 // pred_region
        %p922 = scmp.lt.s32.totalorder %s23, 1
        %s923 = scalar_select %p922, %s23, 1
        %p924 = scmp.lt.s32.totalorder %s24, 3
        %s925 = scalar_select %p924, %s24, 3
        %s926 = smul.addr %s925, 2
        %s927 = smul.addr %s923, 8
        %s928 = sadd.s32 %s926, %s927
        %s929 = smul.addr %s928, 8
        %s930 = scalar_lea.vmem %s3, %s929
      $region56: #{up_block_3d.2} parent=51 // pred_fallthru
        _
      // Predicated region
      $region57: #{up_block_3d.2} parent=51 // pred_check
        %p931 = pneg %p149
      $region58: #{up_block_3d.2} parent=51 // pred_check_branch
        %933 = sbr.rel (%p931) target = $region60
      $region59: #{up_block_3d.2} parent=51 // pred_region
        %p934 = scmp.lt.s32.totalorder %s23, 1
        %s935 = scalar_select %p934, %s23, 1
        %s936 = scalar_lea.vmem %s4, %s935
      $region60: #{up_block_3d.2} parent=51 // pred_fallthru
        _
      // Predicated region
      $region61: #{up_block_3d.2} parent=51 // pred_check
        %p937 = pneg %p175
      $region62: #{up_block_3d.2} parent=51 // pred_check_branch
        %939 = sbr.rel (%p937) target = $region64
      $region63: #{up_block_3d.2} parent=51 // pred_region
        %p940 = scmp.lt.s32.totalorder %s23, 1
        %s941 = scalar_select %p940, %s23, 1
        %s942 = scalar_lea.vmem %s5, %s941
      $region64: #{up_block_3d.2} parent=51 // pred_fallthru
        _
    $region52: #{up_block_3d.2} parent=5 // pred_fallthru
      _
  $region6: #{up_block_3d.2} parent=0 // loop_footer
    %s16 = sadd.s32 1, %s12
  $region7: #{up_block_3d.2} parent=0 // loop_footer_branch
    %11 = sbr.rel target = $region3
  $region8: #{up_block_3d.2} parent=0 // loop_exit
    _

</llo_original>
